<compile_context>
chip_gen: v7x
topology: tpu7x:2x2x1
jax: 0.10.0
libtpu: 0.0.40
codegen_flags: <defaults>
</compile_context>

<pallas_src>
import jax
import jax.numpy as jnp
import numpy as np
from jax.experimental import pallas as pl
from jax.experimental.pallas import tpu as pltpu


def topic_vae_kernel(
    # per-shard batched inputs
    emb_ref,    # (Bb, S, E)   word embeddings in sentence order
    keep_ref,   # (Bb, S, 1)   1.0 - stop-word mask  (1.0 == keep / run RNN step)
    h0_ref,     # (Bb, 1, H)   initial hidden states
    eps_ref,    # (Bb, 1, Lp)  reparameterization noise, lane-padded to Lp=128
    # shared weights (constant across the grid)
    wxy_ref,    # (E, 2H)   [W_ih | W_y] transposed (fused input projection)
    bias_ref,   # (1, H)    b_ih + b_hh (fused RNN bias)
    whh_ref,    # (H, H)    RNNCell W_hh, transposed
    by_ref,     # (1, H)    b_y
    wus_ref,    # (H, 2*Lp) [W_u | W_s] transposed, lane-padded
    bus_ref,    # (1, 2*Lp) [b_u | b_s], lane-padded
    # outputs
    out_ref,    # (Bb, 1, 3*Lp)  [recon | mu | log_sigma], lane-dense
    hlist_ref,  # (Bb, S, H)     h after each word
):
    Bb, S, H = hlist_ref.shape
    Lp = eps_ref.shape[-1]
    E = emb_ref.shape[-1]

    emb = emb_ref[...]                       # (Bb, S, E)
    keep = keep_ref[...]                     # (Bb, S, 1)
    whh = whh_ref[...]                       # (H, H)

    # --- fused projection: one (Bb*S, E)@(E, 2H) matmul feeds both the RNN
    #     input projection and the encoder's emb_sum @ W_y term ---
    proj = jnp.dot(
        emb.reshape(Bb * S, E), wxy_ref[...],
        preferred_element_type=jnp.float32,
    ).reshape(Bb, S, 2 * H)                  # (Bb, S, 2H)
    x_proj = proj[:, :, :H] + bias_ref[...]  # (Bb, S, H)  RNN input projection
    # emb_sum @ W_y == sum_i emb[i] @ W_y  (stop words included, per spec)
    y_sum = jnp.sum(proj[:, :, H:], axis=1)  # (Bb, H)

    # --- statically unrolled batched RNN over the sentence (hot path) ---
    h = h0_ref[:, 0, :]                      # (Bb, H)
    for i in range(S):
        h_next = jnp.tanh(
            x_proj[:, i, :]
            + jnp.dot(h, whh, preferred_element_type=jnp.float32)
        )                                    # (Bb, H)
        # stop-word FMA: keep==0 -> h unchanged; keep==1 -> h += h_next
        h = h + keep[:, i, :] * h_next
        hlist_ref[:, i, :] = h               # store hides under tanh dependency

    # --- encoder MLP on the bag-of-embeddings ---
    gamma = jnp.maximum(y_sum + by_ref[...], 0.0)                 # (Bb, H)
    fused = (
        jnp.dot(gamma, wus_ref[...], preferred_element_type=jnp.float32)
        + bus_ref[...]
    )                                                             # (Bb, 2*Lp)
    mu = fused[:, :Lp]
    log_sigma = fused[:, Lp:]

    # --- reparameterize + decode (exact sigmoid via one EUP tanh) ---
    std = jnp.exp(0.5 * log_sigma)
    z = eps_ref[:, 0, :] * std + mu
    recon = 0.5 * jnp.tanh(0.5 * z) + 0.5

    # single lane-dense store: [recon | mu | log_sigma]
    out_ref[:, 0, :] = jnp.concatenate([recon, fused], axis=-1)   # (Bb, 3*Lp)


def _default_num_shards(B):
    """2-way batch split across TensorCores on v7x; single shard elsewhere."""
    try:
        kind = jax.devices()[0].device_kind.lower()
    except Exception:
        return 1
    if B % 2 == 0 and ("v7" in kind or "7x" in kind):
        return 2
    return 1


def topic_vae_forward(params, emb_seq, sw_mask, h0, eps, num_shards=None):
    """Batched TopicVAE forward.

    emb_seq: (B, S, E)  word embeddings (sentence order)
    sw_mask: (B, S, 1)  stop-word mask (1.0 == stop word)
    h0:      (B, 1, H)  initial hidden states
    eps:     (B, 1, L)  reparameterization noise
    """
    f32 = jnp.float32
    B, S, E = emb_seq.shape
    H = params["wih_t"].shape[1]
    K = params["wk_t"].shape[1]
    L = params["wu_t"].shape[1]
    Lp = 128  # lane-pad the latent dim for lane-dense matmuls / stores

    if num_shards is None:
        num_shards = _default_num_shards(B)
    assert B % num_shards == 0
    Bb = B // num_shards

    # wrapper-side prep (layout plumbing, not kernel compute)
    keep = (1.0 - sw_mask).astype(f32)                      # (B, S, 1)
    bias = (params["b_ih"] + params["b_hh"]).astype(f32)    # fused RNN bias
    eps_p = jnp.pad(eps.astype(f32), ((0, 0), (0, 0), (0, Lp - L)))

    # fused [W_ih | W_y] input-projection weight
    wxy = jnp.concatenate([params["wih_t"], params["wy_t"]], axis=1)  # (E, 2H)

    wu_p = jnp.pad(params["wu_t"], ((0, 0), (0, Lp - L)))
    ws_p = jnp.pad(params["ws_t"], ((0, 0), (0, Lp - L)))
    wus = jnp.concatenate([wu_p, ws_p], axis=1)             # (H, 2*Lp)
    bu_p = jnp.pad(params["b_u"], ((0, 0), (0, Lp - L)))
    bs_p = jnp.pad(params["b_s"], ((0, 0), (0, Lp - L)))
    bus = jnp.concatenate([bu_p, bs_p], axis=1)             # (1, 2*Lp)

    def batched(shape):
        nzeros = len(shape) - 1
        return pl.BlockSpec(shape, lambda g: (g,) + (0,) * nzeros)

    def shared(shape):
        nzeros = len(shape)
        return pl.BlockSpec(shape, lambda g: (0,) * nzeros)

    in_specs = [
        batched((Bb, S, E)),         # emb
        batched((Bb, S, 1)),         # keep
        batched((Bb, 1, H)),         # h0
        batched((Bb, 1, Lp)),        # eps (padded)
        shared((E, 2 * H)),          # [W_ih | W_y]^T
        shared((1, H)),              # b_ih + b_hh
        shared((H, H)),              # W_hh^T
        shared((1, H)),              # b_y
        shared((H, 2 * Lp)),         # [W_u | W_s]^T padded
        shared((1, 2 * Lp)),         # [b_u | b_s] padded
    ]
    out_specs = (
        batched((Bb, 1, 3 * Lp)),    # [recon | mu | log_sigma]
        batched((Bb, S, H)),         # h_list
    )
    out_shape = (
        jax.ShapeDtypeStruct((B, 1, 3 * Lp), f32),
        jax.ShapeDtypeStruct((B, S, H), f32),
    )

    fused_out, h_list = pl.pallas_call(
        topic_vae_kernel,
        grid=(num_shards,),
        out_shape=out_shape,
        in_specs=in_specs,
        out_specs=out_specs,
        compiler_params=pltpu.CompilerParams(
            dimension_semantics=("parallel",),   # splits batch across TCs (v7x)
        ),
    )(
        emb_seq.astype(f32), keep, h0.astype(f32), eps_p,
        wxy, bias, params["whh_t"], params["b_y"], wus, bus,
    )

    # strip lane padding / split fused output in the wrapper (free)
    recon = fused_out[:, :, :L]
    mu = fused_out[:, :, Lp:Lp + L]
    log_sigma = fused_out[:, :, 2 * Lp:2 * Lp + L]
    # q_z: softmax over a single logit is exactly 1.0 -> compile-time constant
    q_z = jnp.ones((B, K, 1), f32)
    return recon, mu, log_sigma, h_list, q_z


def init_params(key, K, emb_size, hidden_size, latent=100):
    # hidden_size must equal K for the original torch module to be runnable
    assert hidden_size == K
    ks = jax.random.split(key, 12)
    n = jax.random.normal
    s = 0.1
    return {
        # RNNCell(emb_size, K): W_ih (K,E), W_hh (K,K) -> stored transposed
        "wih_t": s * n(ks[0], (emb_size, K), jnp.float32),
        "b_ih":  s * n(ks[1], (1, K), jnp.float32),
        "whh_t": s * n(ks[2], (K, K), jnp.float32),
        "b_hh":  s * n(ks[3], (1, K), jnp.float32),
        # K x Linear(hidden,1) stacked (unused by kernel: q_z is exactly 1.0)
        "wk_t":  s * n(ks[4], (hidden_size, K), jnp.float32),
        "b_k":   s * n(ks[5], (1, K), jnp.float32),
        # W_y: Linear(emb_size, hidden)
        "wy_t":  s * n(ks[6], (emb_size, hidden_size), jnp.float32),
        "b_y":   s * n(ks[7], (1, hidden_size), jnp.float32),
        # W_u / W_s: Linear(hidden, 100)
        "wu_t":  s * n(ks[8], (hidden_size, latent), jnp.float32),
        "b_u":   s * n(ks[9], (1, latent), jnp.float32),
        "ws_t":  s * n(ks[10], (hidden_size, latent), jnp.float32),
        "b_s":   s * n(ks[11], (1, latent), jnp.float32),
    }


def _reference_forward(params, emb_seq, sw_mask, h0, eps):
    """Pure NumPy re-implementation of the PyTorch forward, batched over B."""
    p = {k: np.asarray(v) for k, v in params.items()}
    emb_seq = np.asarray(emb_seq); sw = np.asarray(sw_mask)
    h0 = np.asarray(h0); eps = np.asarray(eps)
    B, S, _ = emb_seq.shape
    H = p["wih_t"].shape[1]
    K = p["wk_t"].shape[1]
    L = p["wu_t"].shape[1]
    recon = np.zeros((B, 1, L), np.float32)
    mu_o = np.zeros((B, 1, L), np.float32)
    ls_o = np.zeros((B, 1, L), np.float32)
    hl_o = np.zeros((B, S, H), np.float32)
    qz_o = np.ones((B, K, 1), np.float32)
    for b in range(B):
        h = h0[b]
        for i in range(S):
            if sw[b, i, 0] < 0.5:  # not a stop word
                x = emb_seq[b, i:i + 1]
                h_next = np.tanh(x @ p["wih_t"] + p["b_ih"]
                                 + h @ p["whh_t"] + p["b_hh"])
                h = h_next + h
            hl_o[b, i] = h[0]
        emb_sum = emb_seq[b].sum(axis=0, keepdims=True)
        gamma = np.maximum(emb_sum @ p["wy_t"] + p["b_y"], 0.0)
        mu = gamma @ p["wu_t"] + p["b_u"]
        log_sigma = gamma @ p["ws_t"] + p["b_s"]
        z = eps[b] * np.exp(0.5 * log_sigma) + mu
        recon[b] = 1.0 / (1.0 + np.exp(-z))
        mu_o[b] = mu
        ls_o[b] = log_sigma
    return recon, mu_o, ls_o, hl_o, qz_o


if __name__ == "__main__":
    K = 8            # number of topics == RNN hidden size
    hidden_size = 8  # must equal K (see note at top)
    emb_size = 16
    latent = 100     # fixed by W_u / W_s in the module
    S = 8            # sentence length
    B = 4            # batch of sentences (folded into one kernel block)
    vocab = 32

    key = jax.random.PRNGKey(0)
    k_par, k_tab, k_ids, k_sw, k_h0, k_eps = jax.random.split(key, 6)

    params = init_params(k_par, K, emb_size, hidden_size, latent)

    # synthetic emb_vector: embedding table + word ids / stop-word flags
    # TODO(synk): the original dict-based emb_vector.get(wId) lookup is done
    # here in the wrapper via a table gather; it has no in-kernel equivalent.
    emb_table = 0.1 * jax.random.normal(k_tab, (vocab, emb_size), jnp.float32)
    word_ids = jax.random.randint(k_ids, (B, S), 0, vocab)
    sw_mask = (jax.random.uniform(k_sw, (B, S, 1)) < 0.25).astype(jnp.float32)

    emb_seq = emb_table[word_ids]                                    # (B, S, E)
    h0 = jax.random.normal(k_h0, (B, 1, hidden_size), jnp.float32)   # torch.randn h init
    eps = jax.random.normal(k_eps, (B, 1, latent), jnp.float32)      # reparam noise

    recon, mu, log_sigma, h_list, q_z = jax.block_until_ready(
        topic_vae_forward(params, emb_seq, sw_mask, h0, eps)
    )

    assert recon.shape == (B, 1, latent)
    assert mu.shape == (B, 1, latent)
    assert log_sigma.shape == (B, 1, latent)
    assert h_list.shape == (B, S, hidden_size)
    assert q_z.shape == (B, K, 1)
    assert bool(jnp.all(jnp.isfinite(recon)))

    # check against a pure NumPy reference of the PyTorch forward
    r_ref, mu_ref, ls_ref, hl_ref, qz_ref = _reference_forward(
        params, emb_seq, sw_mask, h0, eps)
    assert np.allclose(np.asarray(h_list), hl_ref, rtol=2e-3, atol=2e-3)
    assert np.allclose(np.asarray(mu), mu_ref, rtol=2e-3, atol=2e-3)
    assert np.allclose(np.asarray(log_sigma), ls_ref, rtol=2e-3, atol=2e-3)
    assert np.allclose(np.asarray(recon), r_ref, rtol=5e-3, atol=5e-3)
    assert np.allclose(np.asarray(q_z), qz_ref)

    print("KERNEL_OK")
</pallas_src>

<mosaic_0001>
module attributes {stable_mosaic.version = 11 : i64} {
  func.func @topic_vae_kernel(%arg0: i32, %arg1: memref<4x8x16xf32, #tpu.memory_space<vmem>>, %arg2: memref<4x8x1xf32, #tpu.memory_space<vmem>>, %arg3: memref<4x1x8xf32, #tpu.memory_space<vmem>>, %arg4: memref<4x1x128xf32, #tpu.memory_space<vmem>>, %arg5: memref<16x16xf32, #tpu.memory_space<vmem>>, %arg6: memref<1x8xf32, #tpu.memory_space<vmem>>, %arg7: memref<8x8xf32, #tpu.memory_space<vmem>>, %arg8: memref<1x8xf32, #tpu.memory_space<vmem>>, %arg9: memref<8x256xf32, #tpu.memory_space<vmem>>, %arg10: memref<1x256xf32, #tpu.memory_space<vmem>>, %arg11: memref<4x1x384xf32, #tpu.memory_space<vmem>>, %arg12: memref<4x8x8xf32, #tpu.memory_space<vmem>>) attributes {dimension_semantics = [#tpu.dimension_semantics<parallel>], iteration_bounds = array<i64: 1>, scalar_prefetch = 0 : i64, scratch_operands = 0 : i64, tpu.core_type = #tpu.core_type<tc>, window_params = [{transform_indices = @transform_0, window_bounds = array<i64: 4, 8, 16>}, {transform_indices = @transform_1, window_bounds = array<i64: 4, 8, 1>}, {transform_indices = @transform_2, window_bounds = array<i64: 4, 1, 8>}, {transform_indices = @transform_3, window_bounds = array<i64: 4, 1, 128>}, {pipeline_mode = #tpu.pipeline_mode<synchronous>, transform_indices = @transform_4, window_bounds = array<i64: 16, 16>}, {pipeline_mode = #tpu.pipeline_mode<synchronous>, transform_indices = @transform_5, window_bounds = array<i64: 1, 8>}, {pipeline_mode = #tpu.pipeline_mode<synchronous>, transform_indices = @transform_6, window_bounds = array<i64: 8, 8>}, {pipeline_mode = #tpu.pipeline_mode<synchronous>, transform_indices = @transform_7, window_bounds = array<i64: 1, 8>}, {pipeline_mode = #tpu.pipeline_mode<synchronous>, transform_indices = @transform_8, window_bounds = array<i64: 8, 256>}, {pipeline_mode = #tpu.pipeline_mode<synchronous>, transform_indices = @transform_9, window_bounds = array<i64: 1, 256>}, {transform_indices = @transform_10, window_bounds = array<i64: 4, 1, 384>}, {transform_indices = @transform_11, window_bounds = array<i64: 4, 8, 8>}]} {
    %c0 = arith.constant 0 : index
    %c0_0 = arith.constant 0 : index
    %c0_1 = arith.constant 0 : index
    %0 = vector.load %arg1[%c0, %c0_0, %c0_1] : memref<4x8x16xf32, #tpu.memory_space<vmem>>, vector<4x8x16xf32>
    %c0_2 = arith.constant 0 : index
    %c0_3 = arith.constant 0 : index
    %c0_4 = arith.constant 0 : index
    %1 = vector.load %arg2[%c0_2, %c0_3, %c0_4] : memref<4x8x1xf32, #tpu.memory_space<vmem>>, vector<4x8x1xf32>
    %c0_5 = arith.constant 0 : index
    %c0_6 = arith.constant 0 : index
    %2 = vector.load %arg7[%c0_5, %c0_6] : memref<8x8xf32, #tpu.memory_space<vmem>>, vector<8x8xf32>
    %3 = vector.shape_cast %0 : vector<4x8x16xf32> to vector<32x16xf32>
    %c0_7 = arith.constant 0 : index
    %c0_8 = arith.constant 0 : index
    %4 = vector.load %arg5[%c0_7, %c0_8] : memref<16x16xf32, #tpu.memory_space<vmem>>, vector<16x16xf32>
    %cst = arith.constant dense<0.000000e+00> : vector<32x16xf32>
    %5 = tpu.matmul %3, %4, %cst {dimension_numbers = #tpu.dot_dimension_numbers<[1], [0], [0], [1], [0, 0, 1, 1], [], []>} : vector<32x16xf32>, vector<16x16xf32>, vector<32x16xf32> -> vector<32x16xf32>
    %6 = vector.shape_cast %5 : vector<32x16xf32> to vector<4x8x16xf32>
    %7 = vector.extract_strided_slice %6 {offsets = [0, 0, 0], sizes = [4, 8, 8], strides = [1, 1, 1]} : vector<4x8x16xf32> to vector<4x8x8xf32>
    %c0_9 = arith.constant 0 : index
    %c0_10 = arith.constant 0 : index
    %8 = vector.load %arg6[%c0_9, %c0_10] : memref<1x8xf32, #tpu.memory_space<vmem>>, vector<1x8xf32>
    %9 = vector.shape_cast %8 : vector<1x8xf32> to vector<1x1x8xf32>
    %10 = vector.broadcast %9 : vector<1x1x8xf32> to vector<4x8x8xf32>
    %11 = arith.addf %7, %10 : vector<4x8x8xf32>
    %12 = vector.extract_strided_slice %6 {offsets = [0, 0, 8], sizes = [4, 8, 8], strides = [1, 1, 1]} : vector<4x8x16xf32> to vector<4x8x8xf32>
    %cst_11 = arith.constant dense<0.000000e+00> : vector<4x8xf32>
    %13 = vector.multi_reduction <add>, %12, %cst_11 [1] : vector<4x8x8xf32> to vector<4x8xf32>
    %c0_12 = arith.constant 0 : index
    %c0_13 = arith.constant 0 : index
    %c0_14 = arith.constant 0 : index
    %14 = vector.load %arg3[%c0_12, %c0_13, %c0_14] : memref<4x1x8xf32, #tpu.memory_space<vmem>>, vector<4x1x8xf32>
    %15 = vector.shape_cast %14 : vector<4x1x8xf32> to vector<4x8xf32>
    %16 = vector.extract_strided_slice %11 {offsets = [0, 0, 0], sizes = [4, 1, 8], strides = [1, 1, 1]} : vector<4x8x8xf32> to vector<4x1x8xf32>
    %17 = vector.shape_cast %16 : vector<4x1x8xf32> to vector<4x8xf32>
    %cst_15 = arith.constant dense<0.000000e+00> : vector<4x8xf32>
    %18 = tpu.matmul %15, %2, %cst_15 {dimension_numbers = #tpu.dot_dimension_numbers<[1], [0], [0], [1], [0, 0, 1, 1], [], []>} : vector<4x8xf32>, vector<8x8xf32>, vector<4x8xf32> -> vector<4x8xf32>
    %19 = arith.addf %17, %18 : vector<4x8xf32>
    %20 = math.tanh %19 : vector<4x8xf32>
    %21 = vector.extract_strided_slice %1 {offsets = [0, 0, 0], sizes = [4, 1, 1], strides = [1, 1, 1]} : vector<4x8x1xf32> to vector<4x1x1xf32>
    %22 = vector.shape_cast %21 : vector<4x1x1xf32> to vector<4x1xf32>
    %23 = vector.broadcast %22 : vector<4x1xf32> to vector<4x8xf32>
    %24 = arith.mulf %23, %20 : vector<4x8xf32>
    %25 = arith.addf %15, %24 : vector<4x8xf32>
    %c0_16 = arith.constant 0 : index
    %c0_17 = arith.constant 0 : index
    %c0_18 = arith.constant 0 : index
    %26 = vector.load %arg12[%c0_16, %c0_17, %c0_18] : memref<4x8x8xf32, #tpu.memory_space<vmem>>, vector<4x1x8xf32>
    %27 = vector.shape_cast %26 : vector<4x1x8xf32> to vector<4x8xf32>
    %28 = vector.shape_cast %25 : vector<4x8xf32> to vector<4x1x8xf32>
    tpu.vector_store %arg12[%c0_16, %c0_17, %c0_18], %28 {strides = array<i32>} : memref<4x8x8xf32, #tpu.memory_space<vmem>>, vector<4x1x8xf32>,
    %29 = vector.extract_strided_slice %11 {offsets = [0, 1, 0], sizes = [4, 1, 8], strides = [1, 1, 1]} : vector<4x8x8xf32> to vector<4x1x8xf32>
    %30 = vector.shape_cast %29 : vector<4x1x8xf32> to vector<4x8xf32>
    %cst_19 = arith.constant dense<0.000000e+00> : vector<4x8xf32>
    %31 = tpu.matmul %25, %2, %cst_19 {dimension_numbers = #tpu.dot_dimension_numbers<[1], [0], [0], [1], [0, 0, 1, 1], [], []>} : vector<4x8xf32>, vector<8x8xf32>, vector<4x8xf32> -> vector<4x8xf32>
    %32 = arith.addf %30, %31 : vector<4x8xf32>
    %33 = math.tanh %32 : vector<4x8xf32>
    %34 = vector.extract_strided_slice %1 {offsets = [0, 1, 0], sizes = [4, 1, 1], strides = [1, 1, 1]} : vector<4x8x1xf32> to vector<4x1x1xf32>
    %35 = vector.shape_cast %34 : vector<4x1x1xf32> to vector<4x1xf32>
    %36 = vector.broadcast %35 : vector<4x1xf32> to vector<4x8xf32>
    %37 = arith.mulf %36, %33 : vector<4x8xf32>
    %38 = arith.addf %25, %37 : vector<4x8xf32>
    %c0_20 = arith.constant 0 : index
    %c1 = arith.constant 1 : index
    %c0_21 = arith.constant 0 : index
    %39 = vector.load %arg12[%c0_20, %c1, %c0_21] : memref<4x8x8xf32, #tpu.memory_space<vmem>>, vector<4x1x8xf32>
    %40 = vector.shape_cast %39 : vector<4x1x8xf32> to vector<4x8xf32>
    %41 = vector.shape_cast %38 : vector<4x8xf32> to vector<4x1x8xf32>
    tpu.vector_store %arg12[%c0_20, %c1, %c0_21], %41 {strides = array<i32>} : memref<4x8x8xf32, #tpu.memory_space<vmem>>, vector<4x1x8xf32>,
    %42 = vector.extract_strided_slice %11 {offsets = [0, 2, 0], sizes = [4, 1, 8], strides = [1, 1, 1]} : vector<4x8x8xf32> to vector<4x1x8xf32>
    %43 = vector.shape_cast %42 : vector<4x1x8xf32> to vector<4x8xf32>
    %cst_22 = arith.constant dense<0.000000e+00> : vector<4x8xf32>
    %44 = tpu.matmul %38, %2, %cst_22 {dimension_numbers = #tpu.dot_dimension_numbers<[1], [0], [0], [1], [0, 0, 1, 1], [], []>} : vector<4x8xf32>, vector<8x8xf32>, vector<4x8xf32> -> vector<4x8xf32>
    %45 = arith.addf %43, %44 : vector<4x8xf32>
    %46 = math.tanh %45 : vector<4x8xf32>
    %47 = vector.extract_strided_slice %1 {offsets = [0, 2, 0], sizes = [4, 1, 1], strides = [1, 1, 1]} : vector<4x8x1xf32> to vector<4x1x1xf32>
    %48 = vector.shape_cast %47 : vector<4x1x1xf32> to vector<4x1xf32>
    %49 = vector.broadcast %48 : vector<4x1xf32> to vector<4x8xf32>
    %50 = arith.mulf %49, %46 : vector<4x8xf32>
    %51 = arith.addf %38, %50 : vector<4x8xf32>
    %c0_23 = arith.constant 0 : index
    %c2 = arith.constant 2 : index
    %c0_24 = arith.constant 0 : index
    %52 = vector.load %arg12[%c0_23, %c2, %c0_24] : memref<4x8x8xf32, #tpu.memory_space<vmem>>, vector<4x1x8xf32>
    %53 = vector.shape_cast %52 : vector<4x1x8xf32> to vector<4x8xf32>
    %54 = vector.shape_cast %51 : vector<4x8xf32> to vector<4x1x8xf32>
    tpu.vector_store %arg12[%c0_23, %c2, %c0_24], %54 {strides = array<i32>} : memref<4x8x8xf32, #tpu.memory_space<vmem>>, vector<4x1x8xf32>,
    %55 = vector.extract_strided_slice %11 {offsets = [0, 3, 0], sizes = [4, 1, 8], strides = [1, 1, 1]} : vector<4x8x8xf32> to vector<4x1x8xf32>
    %56 = vector.shape_cast %55 : vector<4x1x8xf32> to vector<4x8xf32>
    %cst_25 = arith.constant dense<0.000000e+00> : vector<4x8xf32>
    %57 = tpu.matmul %51, %2, %cst_25 {dimension_numbers = #tpu.dot_dimension_numbers<[1], [0], [0], [1], [0, 0, 1, 1], [], []>} : vector<4x8xf32>, vector<8x8xf32>, vector<4x8xf32> -> vector<4x8xf32>
    %58 = arith.addf %56, %57 : vector<4x8xf32>
    %59 = math.tanh %58 : vector<4x8xf32>
    %60 = vector.extract_strided_slice %1 {offsets = [0, 3, 0], sizes = [4, 1, 1], strides = [1, 1, 1]} : vector<4x8x1xf32> to vector<4x1x1xf32>
    %61 = vector.shape_cast %60 : vector<4x1x1xf32> to vector<4x1xf32>
    %62 = vector.broadcast %61 : vector<4x1xf32> to vector<4x8xf32>
    %63 = arith.mulf %62, %59 : vector<4x8xf32>
    %64 = arith.addf %51, %63 : vector<4x8xf32>
    %c0_26 = arith.constant 0 : index
    %c3 = arith.constant 3 : index
    %c0_27 = arith.constant 0 : index
    %65 = vector.load %arg12[%c0_26, %c3, %c0_27] : memref<4x8x8xf32, #tpu.memory_space<vmem>>, vector<4x1x8xf32>
    %66 = vector.shape_cast %65 : vector<4x1x8xf32> to vector<4x8xf32>
    %67 = vector.shape_cast %64 : vector<4x8xf32> to vector<4x1x8xf32>
    tpu.vector_store %arg12[%c0_26, %c3, %c0_27], %67 {strides = array<i32>} : memref<4x8x8xf32, #tpu.memory_space<vmem>>, vector<4x1x8xf32>,
    %68 = vector.extract_strided_slice %11 {offsets = [0, 4, 0], sizes = [4, 1, 8], strides = [1, 1, 1]} : vector<4x8x8xf32> to vector<4x1x8xf32>
    %69 = vector.shape_cast %68 : vector<4x1x8xf32> to vector<4x8xf32>
    %cst_28 = arith.constant dense<0.000000e+00> : vector<4x8xf32>
    %70 = tpu.matmul %64, %2, %cst_28 {dimension_numbers = #tpu.dot_dimension_numbers<[1], [0], [0], [1], [0, 0, 1, 1], [], []>} : vector<4x8xf32>, vector<8x8xf32>, vector<4x8xf32> -> vector<4x8xf32>
    %71 = arith.addf %69, %70 : vector<4x8xf32>
    %72 = math.tanh %71 : vector<4x8xf32>
    %73 = vector.extract_strided_slice %1 {offsets = [0, 4, 0], sizes = [4, 1, 1], strides = [1, 1, 1]} : vector<4x8x1xf32> to vector<4x1x1xf32>
    %74 = vector.shape_cast %73 : vector<4x1x1xf32> to vector<4x1xf32>
    %75 = vector.broadcast %74 : vector<4x1xf32> to vector<4x8xf32>
    %76 = arith.mulf %75, %72 : vector<4x8xf32>
    %77 = arith.addf %64, %76 : vector<4x8xf32>
    %c0_29 = arith.constant 0 : index
    %c4 = arith.constant 4 : index
    %c0_30 = arith.constant 0 : index
    %78 = vector.load %arg12[%c0_29, %c4, %c0_30] : memref<4x8x8xf32, #tpu.memory_space<vmem>>, vector<4x1x8xf32>
    %79 = vector.shape_cast %78 : vector<4x1x8xf32> to vector<4x8xf32>
    %80 = vector.shape_cast %77 : vector<4x8xf32> to vector<4x1x8xf32>
    tpu.vector_store %arg12[%c0_29, %c4, %c0_30], %80 {strides = array<i32>} : memref<4x8x8xf32, #tpu.memory_space<vmem>>, vector<4x1x8xf32>,
    %81 = vector.extract_strided_slice %11 {offsets = [0, 5, 0], sizes = [4, 1, 8], strides = [1, 1, 1]} : vector<4x8x8xf32> to vector<4x1x8xf32>
    %82 = vector.shape_cast %81 : vector<4x1x8xf32> to vector<4x8xf32>
    %cst_31 = arith.constant dense<0.000000e+00> : vector<4x8xf32>
    %83 = tpu.matmul %77, %2, %cst_31 {dimension_numbers = #tpu.dot_dimension_numbers<[1], [0], [0], [1], [0, 0, 1, 1], [], []>} : vector<4x8xf32>, vector<8x8xf32>, vector<4x8xf32> -> vector<4x8xf32>
    %84 = arith.addf %82, %83 : vector<4x8xf32>
    %85 = math.tanh %84 : vector<4x8xf32>
    %86 = vector.extract_strided_slice %1 {offsets = [0, 5, 0], sizes = [4, 1, 1], strides = [1, 1, 1]} : vector<4x8x1xf32> to vector<4x1x1xf32>
    %87 = vector.shape_cast %86 : vector<4x1x1xf32> to vector<4x1xf32>
    %88 = vector.broadcast %87 : vector<4x1xf32> to vector<4x8xf32>
    %89 = arith.mulf %88, %85 : vector<4x8xf32>
    %90 = arith.addf %77, %89 : vector<4x8xf32>
    %c0_32 = arith.constant 0 : index
    %c5 = arith.constant 5 : index
    %c0_33 = arith.constant 0 : index
    %91 = vector.load %arg12[%c0_32, %c5, %c0_33] : memref<4x8x8xf32, #tpu.memory_space<vmem>>, vector<4x1x8xf32>
    %92 = vector.shape_cast %91 : vector<4x1x8xf32> to vector<4x8xf32>
    %93 = vector.shape_cast %90 : vector<4x8xf32> to vector<4x1x8xf32>
    tpu.vector_store %arg12[%c0_32, %c5, %c0_33], %93 {strides = array<i32>} : memref<4x8x8xf32, #tpu.memory_space<vmem>>, vector<4x1x8xf32>,
    %94 = vector.extract_strided_slice %11 {offsets = [0, 6, 0], sizes = [4, 1, 8], strides = [1, 1, 1]} : vector<4x8x8xf32> to vector<4x1x8xf32>
    %95 = vector.shape_cast %94 : vector<4x1x8xf32> to vector<4x8xf32>
    %cst_34 = arith.constant dense<0.000000e+00> : vector<4x8xf32>
    %96 = tpu.matmul %90, %2, %cst_34 {dimension_numbers = #tpu.dot_dimension_numbers<[1], [0], [0], [1], [0, 0, 1, 1], [], []>} : vector<4x8xf32>, vector<8x8xf32>, vector<4x8xf32> -> vector<4x8xf32>
    %97 = arith.addf %95, %96 : vector<4x8xf32>
    %98 = math.tanh %97 : vector<4x8xf32>
    %99 = vector.extract_strided_slice %1 {offsets = [0, 6, 0], sizes = [4, 1, 1], strides = [1, 1, 1]} : vector<4x8x1xf32> to vector<4x1x1xf32>
    %100 = vector.shape_cast %99 : vector<4x1x1xf32> to vector<4x1xf32>
    %101 = vector.broadcast %100 : vector<4x1xf32> to vector<4x8xf32>
    %102 = arith.mulf %101, %98 : vector<4x8xf32>
    %103 = arith.addf %90, %102 : vector<4x8xf32>
    %c0_35 = arith.constant 0 : index
    %c6 = arith.constant 6 : index
    %c0_36 = arith.constant 0 : index
    %104 = vector.load %arg12[%c0_35, %c6, %c0_36] : memref<4x8x8xf32, #tpu.memory_space<vmem>>, vector<4x1x8xf32>
    %105 = vector.shape_cast %104 : vector<4x1x8xf32> to vector<4x8xf32>
    %106 = vector.shape_cast %103 : vector<4x8xf32> to vector<4x1x8xf32>
    tpu.vector_store %arg12[%c0_35, %c6, %c0_36], %106 {strides = array<i32>} : memref<4x8x8xf32, #tpu.memory_space<vmem>>, vector<4x1x8xf32>,
    %107 = vector.extract_strided_slice %11 {offsets = [0, 7, 0], sizes = [4, 1, 8], strides = [1, 1, 1]} : vector<4x8x8xf32> to vector<4x1x8xf32>
    %108 = vector.shape_cast %107 : vector<4x1x8xf32> to vector<4x8xf32>
    %cst_37 = arith.constant dense<0.000000e+00> : vector<4x8xf32>
    %109 = tpu.matmul %103, %2, %cst_37 {dimension_numbers = #tpu.dot_dimension_numbers<[1], [0], [0], [1], [0, 0, 1, 1], [], []>} : vector<4x8xf32>, vector<8x8xf32>, vector<4x8xf32> -> vector<4x8xf32>
    %110 = arith.addf %108, %109 : vector<4x8xf32>
    %111 = math.tanh %110 : vector<4x8xf32>
    %112 = vector.extract_strided_slice %1 {offsets = [0, 7, 0], sizes = [4, 1, 1], strides = [1, 1, 1]} : vector<4x8x1xf32> to vector<4x1x1xf32>
    %113 = vector.shape_cast %112 : vector<4x1x1xf32> to vector<4x1xf32>
    %114 = vector.broadcast %113 : vector<4x1xf32> to vector<4x8xf32>
    %115 = arith.mulf %114, %111 : vector<4x8xf32>
    %116 = arith.addf %103, %115 : vector<4x8xf32>
    %c0_38 = arith.constant 0 : index
    %c7 = arith.constant 7 : index
    %c0_39 = arith.constant 0 : index
    %117 = vector.load %arg12[%c0_38, %c7, %c0_39] : memref<4x8x8xf32, #tpu.memory_space<vmem>>, vector<4x1x8xf32>
    %118 = vector.shape_cast %117 : vector<4x1x8xf32> to vector<4x8xf32>
    %119 = vector.shape_cast %116 : vector<4x8xf32> to vector<4x1x8xf32>
    tpu.vector_store %arg12[%c0_38, %c7, %c0_39], %119 {strides = array<i32>} : memref<4x8x8xf32, #tpu.memory_space<vmem>>, vector<4x1x8xf32>,
    %c0_40 = arith.constant 0 : index
    %c0_41 = arith.constant 0 : index
    %120 = vector.load %arg8[%c0_40, %c0_41] : memref<1x8xf32, #tpu.memory_space<vmem>>, vector<1x8xf32>
    %121 = vector.broadcast %120 : vector<1x8xf32> to vector<4x8xf32>
    %122 = arith.addf %13, %121 : vector<4x8xf32>
    %cst_42 = arith.constant 0.000000e+00 : f32
    %123 = vector.broadcast %cst_42 : f32 to vector<4x8xf32>
    %124 = arith.maximumf %122, %123 : vector<4x8xf32>
    %c0_43 = arith.constant 0 : index
    %c0_44 = arith.constant 0 : index
    %125 = vector.load %arg9[%c0_43, %c0_44] : memref<8x256xf32, #tpu.memory_space<vmem>>, vector<8x256xf32>
    %cst_45 = arith.constant dense<0.000000e+00> : vector<4x256xf32>
    %126 = tpu.matmul %124, %125, %cst_45 {dimension_numbers = #tpu.dot_dimension_numbers<[1], [0], [0], [1], [0, 0, 1, 1], [], []>} : vector<4x8xf32>, vector<8x256xf32>, vector<4x256xf32> -> vector<4x256xf32>
    %c0_46 = arith.constant 0 : index
    %c0_47 = arith.constant 0 : index
    %127 = vector.load %arg10[%c0_46, %c0_47] : memref<1x256xf32, #tpu.memory_space<vmem>>, vector<1x256xf32>
    %128 = vector.broadcast %127 : vector<1x256xf32> to vector<4x256xf32>
    %129 = arith.addf %126, %128 : vector<4x256xf32>
    %130 = vector.extract_strided_slice %129 {offsets = [0, 0], sizes = [4, 128], strides = [1, 1]} : vector<4x256xf32> to vector<4x128xf32>
    %131 = vector.extract_strided_slice %129 {offsets = [0, 128], sizes = [4, 128], strides = [1, 1]} : vector<4x256xf32> to vector<4x128xf32>
    %cst_48 = arith.constant 5.000000e-01 : f32
    %132 = vector.broadcast %cst_48 : f32 to vector<4x128xf32>
    %133 = arith.mulf %132, %131 : vector<4x128xf32>
    %134 = math.exp %133 : vector<4x128xf32>
    %c0_49 = arith.constant 0 : index
    %c0_50 = arith.constant 0 : index
    %c0_51 = arith.constant 0 : index
    %135 = vector.load %arg4[%c0_49, %c0_50, %c0_51] : memref<4x1x128xf32, #tpu.memory_space<vmem>>, vector<4x1x128xf32>
    %136 = vector.shape_cast %135 : vector<4x1x128xf32> to vector<4x128xf32>
    %137 = arith.mulf %136, %134 : vector<4x128xf32>
    %138 = arith.addf %137, %130 : vector<4x128xf32>
    %cst_52 = arith.constant 5.000000e-01 : f32
    %139 = vector.broadcast %cst_52 : f32 to vector<4x128xf32>
    %140 = arith.mulf %139, %138 : vector<4x128xf32>
    %141 = math.tanh %140 : vector<4x128xf32>
    %cst_53 = arith.constant 5.000000e-01 : f32
    %142 = vector.broadcast %cst_53 : f32 to vector<4x128xf32>
    %143 = arith.mulf %142, %141 : vector<4x128xf32>
    %cst_54 = arith.constant 5.000000e-01 : f32
    %144 = vector.broadcast %cst_54 : f32 to vector<4x128xf32>
    %145 = arith.addf %143, %144 : vector<4x128xf32>
    %146 = tpu.concatenate %145, %129 in 1 : vector<4x128xf32>, vector<4x256xf32> -> vector<4x384xf32>
    %c0_55 = arith.constant 0 : index
    %c0_56 = arith.constant 0 : index
    %c0_57 = arith.constant 0 : index
    %147 = vector.load %arg11[%c0_55, %c0_56, %c0_57] : memref<4x1x384xf32, #tpu.memory_space<vmem>>, vector<4x1x384xf32>
    %148 = vector.shape_cast %147 : vector<4x1x384xf32> to vector<4x384xf32>
    %149 = vector.shape_cast %146 : vector<4x384xf32> to vector<4x1x384xf32>
    tpu.vector_store %arg11[%c0_55, %c0_56, %c0_57], %149 {strides = array<i32>} : memref<4x1x384xf32, #tpu.memory_space<vmem>>, vector<4x1x384xf32>,
    return
  }
  func.func @transform_0(%arg0: i32) -> (i32, i32, i32) {
    %c0_i32 = arith.constant 0 : i32
    %c0_i32_0 = arith.constant 0 : i32
    %c0_i32_1 = arith.constant 0 : i32
    return %arg0, %c0_i32, %c0_i32_0 : i32, i32, i32
  }
  func.func @transform_1(%arg0: i32) -> (i32, i32, i32) {
    %c0_i32 = arith.constant 0 : i32
    %c0_i32_0 = arith.constant 0 : i32
    %c0_i32_1 = arith.constant 0 : i32
    return %arg0, %c0_i32, %c0_i32_0 : i32, i32, i32
  }
  func.func @transform_2(%arg0: i32) -> (i32, i32, i32) {
    %c0_i32 = arith.constant 0 : i32
    %c0_i32_0 = arith.constant 0 : i32
    %c0_i32_1 = arith.constant 0 : i32
    return %arg0, %c0_i32, %c0_i32_0 : i32, i32, i32
  }
  func.func @transform_3(%arg0: i32) -> (i32, i32, i32) {
    %c0_i32 = arith.constant 0 : i32
    %c0_i32_0 = arith.constant 0 : i32
    %c0_i32_1 = arith.constant 0 : i32
    return %arg0, %c0_i32, %c0_i32_0 : i32, i32, i32
  }
  func.func @transform_4(%arg0: i32) -> (i32, i32) {
    %c0_i32 = arith.constant 0 : i32
    %c0_i32_0 = arith.constant 0 : i32
    %c0_i32_1 = arith.constant 0 : i32
    return %c0_i32, %c0_i32_0 : i32, i32
  }
  func.func @transform_5(%arg0: i32) -> (i32, i32) {
    %c0_i32 = arith.constant 0 : i32
    %c0_i32_0 = arith.constant 0 : i32
    %c0_i32_1 = arith.constant 0 : i32
    return %c0_i32, %c0_i32_0 : i32, i32
  }
  func.func @transform_6(%arg0: i32) -> (i32, i32) {
    %c0_i32 = arith.constant 0 : i32
    %c0_i32_0 = arith.constant 0 : i32
    %c0_i32_1 = arith.constant 0 : i32
    return %c0_i32, %c0_i32_0 : i32, i32
  }
  func.func @transform_7(%arg0: i32) -> (i32, i32) {
    %c0_i32 = arith.constant 0 : i32
    %c0_i32_0 = arith.constant 0 : i32
    %c0_i32_1 = arith.constant 0 : i32
    return %c0_i32, %c0_i32_0 : i32, i32
  }
  func.func @transform_8(%arg0: i32) -> (i32, i32) {
    %c0_i32 = arith.constant 0 : i32
    %c0_i32_0 = arith.constant 0 : i32
    %c0_i32_1 = arith.constant 0 : i32
    return %c0_i32, %c0_i32_0 : i32, i32
  }
  func.func @transform_9(%arg0: i32) -> (i32, i32) {
    %c0_i32 = arith.constant 0 : i32
    %c0_i32_0 = arith.constant 0 : i32
    %c0_i32_1 = arith.constant 0 : i32
    return %c0_i32, %c0_i32_0 : i32, i32
  }
  func.func @transform_10(%arg0: i32) -> (i32, i32, i32) {
    %c0_i32 = arith.constant 0 : i32
    %c0_i32_0 = arith.constant 0 : i32
    %c0_i32_1 = arith.constant 0 : i32
    return %arg0, %c0_i32, %c0_i32_0 : i32, i32, i32
  }
  func.func @transform_11(%arg0: i32) -> (i32, i32, i32) {
    %c0_i32 = arith.constant 0 : i32
    %c0_i32_0 = arith.constant 0 : i32
    %c0_i32_1 = arith.constant 0 : i32
    return %arg0, %c0_i32, %c0_i32_0 : i32, i32, i32
  }
}

</mosaic_0001>

<llo_original>
// kernel: tpu_custom_call.1
$region0: #{tpu_custom_call.1}
  #allocation0 [shape = 'u32[]', space=smem, size = 0x4, offset = 0x4, fixed_abs, tag = 'smem constant byte address 0x4 - core index']
  #allocation1 [shape = 'u32[144,128]{1,0:T(1,128)}', space=vmem, size = 0x12000, scoped, tag = 'internal scratch']
  %s0 = inlined_call_operand.vmem [shape: f32[4,8,16], index: 0, kind: input, shape index: {}]
  %s1 = inlined_call_operand.vmem [shape: f32[4,8,1], index: 1, kind: input, shape index: {}]
  %s2 = inlined_call_operand.hbm [shape: f32[4,1,8], index: 2, kind: input, shape index: {}]
  %s3 = inlined_call_operand.hbm [shape: f32[4,1,128], index: 3, kind: input, shape index: {}]
  %s4 = inlined_call_operand.vmem [shape: f32[16,16], index: 4, kind: input, shape index: {}]
  %s5 = inlined_call_operand.hbm [shape: f32[1,8], index: 5, kind: input, shape index: {}]
  %s6 = inlined_call_operand.hbm [shape: f32[8,8], index: 6, kind: input, shape index: {}]
  %s7 = inlined_call_operand.hbm [shape: f32[1,8], index: 7, kind: input, shape index: {}]
  %s8 = inlined_call_operand.vmem [shape: f32[8,256], index: 8, kind: input, shape index: {}]
  %s9 = inlined_call_operand.vmem [shape: f32[1,256], index: 9, kind: input, shape index: {}]
  %s10 = inlined_call_operand.hbm [shape: f32[4,1,384], index: 10, kind: output, shape index: {0}]
  %s11 = inlined_call_operand.hbm [shape: f32[4,8,8], index: 11, kind: output, shape index: {1}]
  %12 = xla_tuple %s10, %s11
  %s13 = sld [smem:[#allocation0]]
  $region78: #{tpu_custom_call.1} parent=0
    _
  %s15 = ssub.s32 1, %s13
  %s16 = scalar_select 0, %s15, %s13
  $region1: #{tpu_custom_call.1} parent=0
    #allocation2 [shape = 'u8[2048]{0}', space=vmem, size = 0x800, scoped, tag = 'input window, operand 2, single buffered']
    #allocation3 [shape = 's32[1]{0}', space=sflag, size = 0x4, scoped, tag = 'scoped memory for tpu_custom_call.1']
    #allocation4 [shape = 's32[1]{0}', space=sflag, size = 0x4, scoped, tag = 'scoped memory for tpu_custom_call.1']
    #allocation5 [shape = 'u8[2048]{0}', space=vmem, size = 0x800, scoped, tag = 'input window, operand 3, single buffered']
    #allocation6 [shape = 's32[1]{0}', space=sflag, size = 0x4, scoped, tag = 'scoped memory for tpu_custom_call.1']
    #allocation7 [shape = 'u8[512]{0}', space=vmem, size = 0x400, scoped, tag = 'input window, operand 5, single buffered']
    #allocation8 [shape = 'u8[4096]{0}', space=vmem, size = 0x1000, scoped, tag = 'input window, operand 6, single buffered']
    #allocation9 [shape = 's32[1]{0}', space=sflag, size = 0x4, scoped, tag = 'scoped memory for tpu_custom_call.1']
    #allocation10 [shape = 'u8[512]{0}', space=vmem, size = 0x400, scoped, tag = 'input window, operand 7, single buffered']
    #allocation11 [shape = 'u8[6144]{0}', space=vmem, size = 0x1800, scoped, tag = 'output window, operand 0, single buffered']
    #allocation12 [shape = 'u8[16384]{0}', space=vmem, size = 0x4000, scoped, tag = 'output window, operand 1, single buffered']
    #allocation13 [shape = 's32[1]{0}', space=sflag, size = 0x4, scoped, tag = 'scoped memory for tpu_custom_call.1']
    %17 = vsyncpa [#allocation3], 0
    %18 = vsyncpa [#allocation6], 0
    %19 = vsyncpa [#allocation9], 0
    %20 = vsyncpa [#allocation4], 0
    %21 = vsyncpa [#allocation13], 0
    // Predicated region
    $region2: #{tpu_custom_call.1} parent=1 // pred_check
      _
    $region3: #{tpu_custom_call.1} parent=1 // pred_check_branch
      %23 = sbr.rel (0) target = $region5
    $region4: #{tpu_custom_call.1} parent=1 // pred_region
      _
    $region5: #{tpu_custom_call.1} parent=1 // pred_fallthru
      _
    // Predicated region
    $region6: #{tpu_custom_call.1} parent=1 // pred_check
      _
    $region7: #{tpu_custom_call.1} parent=1 // pred_check_branch
      %25 = sbr.rel (0) target = $region9
    $region8: #{tpu_custom_call.1} parent=1 // pred_region
      _
    $region9: #{tpu_custom_call.1} parent=1 // pred_fallthru
      _
    // Predicated region
    $region10: #{tpu_custom_call.1} parent=1 // pred_check
      _
    $region11: #{tpu_custom_call.1} parent=1 // pred_check_branch
      %27 = sbr.rel (0) target = $region13
    $region12: #{tpu_custom_call.1} parent=1 // pred_region
      %s29 = ssub.s32 64, 64
      %30 = vsyncadd [#allocation3], %s29
      %s31 = sshll.u32 [#allocation2], 4
      %s32 = int_to_ptr.vmem [resolvable:$true] %s31
      %37 = dma.hbm_to_vmem [thread:$0]  %s2, 64, %s32, [#allocation3], 16, 16, 1
    $region13: #{tpu_custom_call.1} parent=1 // pred_fallthru
      _
    // Predicated region
    $region14: #{tpu_custom_call.1} parent=1 // pred_check
      _
    $region15: #{tpu_custom_call.1} parent=1 // pred_check_branch
      %39 = sbr.rel (0) target = $region17
    $region16: #{tpu_custom_call.1} parent=1 // pred_region
      %s41 = ssub.s32 64, 64
      %42 = vsyncadd [#allocation6], %s41
      %s43 = sshll.u32 [#allocation5], 4
      %s44 = int_to_ptr.vmem [resolvable:$true] %s43
      %49 = dma.hbm_to_vmem [thread:$0]  %s3, 64, %s44, [#allocation6], 16, 16, 1
    $region17: #{tpu_custom_call.1} parent=1 // pred_fallthru
      _
    // Predicated region
    $region18: #{tpu_custom_call.1} parent=1 // pred_check
      _
    $region19: #{tpu_custom_call.1} parent=1 // pred_check_branch
      %51 = sbr.rel (0) target = $region21
    $region20: #{tpu_custom_call.1} parent=1 // pred_region
      _
    $region21: #{tpu_custom_call.1} parent=1 // pred_fallthru
      _
    // Predicated region
    $region22: #{tpu_custom_call.1} parent=1 // pred_check
      _
    $region23: #{tpu_custom_call.1} parent=1 // pred_check_branch
      %53 = sbr.rel (0) target = $region25
    $region24: #{tpu_custom_call.1} parent=1 // pred_region
      %s55 = ssub.s32 16, 16
      %56 = vsyncadd [#allocation6], %s55
      %s58 = sshll.u32 [#allocation7], 4
      %s59 = int_to_ptr.vmem [resolvable:$true] %s58
      %61 = dma.hbm_to_vmem [thread:$0]  %s5, 16, %s59, [#allocation6]
    $region25: #{tpu_custom_call.1} parent=1 // pred_fallthru
      _
    // Predicated region
    $region26: #{tpu_custom_call.1} parent=1 // pred_check
      _
    $region27: #{tpu_custom_call.1} parent=1 // pred_check_branch
      %63 = sbr.rel (0) target = $region29
    $region28: #{tpu_custom_call.1} parent=1 // pred_region
      %s65 = ssub.s32 128, 128
      %66 = vsyncadd [#allocation9], %s65
      %s68 = sshll.u32 [#allocation8], 4
      %s69 = int_to_ptr.vmem [resolvable:$true] %s68
      %71 = dma.hbm_to_vmem [thread:$0]  %s6, 128, %s69, [#allocation9]
    $region29: #{tpu_custom_call.1} parent=1 // pred_fallthru
      _
    // Predicated region
    $region30: #{tpu_custom_call.1} parent=1 // pred_check
      _
    $region31: #{tpu_custom_call.1} parent=1 // pred_check_branch
      %73 = sbr.rel (0) target = $region33
    $region32: #{tpu_custom_call.1} parent=1 // pred_region
      %s75 = ssub.s32 16, 16
      %76 = vsyncadd [#allocation9], %s75
      %s78 = sshll.u32 [#allocation10], 4
      %s79 = int_to_ptr.vmem [resolvable:$true] %s78
      %81 = dma.hbm_to_vmem [thread:$0]  %s7, 16, %s79, [#allocation9]
    $region33: #{tpu_custom_call.1} parent=1 // pred_fallthru
      _
    // Predicated region
    $region34: #{tpu_custom_call.1} parent=1 // pred_check
      _
    $region35: #{tpu_custom_call.1} parent=1 // pred_check_branch
      %83 = sbr.rel (0) target = $region37
    $region36: #{tpu_custom_call.1} parent=1 // pred_region
      _
    $region37: #{tpu_custom_call.1} parent=1 // pred_fallthru
      _
    // Predicated region
    $region38: #{tpu_custom_call.1} parent=1 // pred_check
      _
    $region39: #{tpu_custom_call.1} parent=1 // pred_check_branch
      %85 = sbr.rel (0) target = $region41
    $region40: #{tpu_custom_call.1} parent=1 // pred_region
      _
    $region41: #{tpu_custom_call.1} parent=1 // pred_fallthru
      _
    // Predicated region
    $region42: #{tpu_custom_call.1} parent=1 // pred_check
      _
    $region43: #{tpu_custom_call.1} parent=1 // pred_check_branch
      %87 = sbr.rel (0) target = $region45
    $region44: #{tpu_custom_call.1} parent=1 // pred_region
      %88 = dma.done [#allocation3], 64
    $region45: #{tpu_custom_call.1} parent=1 // pred_fallthru
      _
    // Predicated region
    $region46: #{tpu_custom_call.1} parent=1 // pred_check
      _
    $region47: #{tpu_custom_call.1} parent=1 // pred_check_branch
      %90 = sbr.rel (0) target = $region49
    $region48: #{tpu_custom_call.1} parent=1 // pred_region
      %91 = dma.done [#allocation6], 64
    $region49: #{tpu_custom_call.1} parent=1 // pred_fallthru
      _
    // Predicated region
    $region50: #{tpu_custom_call.1} parent=1 // pred_check
      _
    $region51: #{tpu_custom_call.1} parent=1 // pred_check_branch
      %93 = sbr.rel (0) target = $region53
    $region52: #{tpu_custom_call.1} parent=1 // pred_region
      %94 = dma.done [#allocation6], 16
    $region53: #{tpu_custom_call.1} parent=1 // pred_fallthru
      _
    // Predicated region
    $region54: #{tpu_custom_call.1} parent=1 // pred_check
      _
    $region55: #{tpu_custom_call.1} parent=1 // pred_check_branch
      %96 = sbr.rel (0) target = $region57
    $region56: #{tpu_custom_call.1} parent=1 // pred_region
      %97 = dma.done [#allocation9], 128
    $region57: #{tpu_custom_call.1} parent=1 // pred_fallthru
      _
    // Predicated region
    $region58: #{tpu_custom_call.1} parent=1 // pred_check
      _
    $region59: #{tpu_custom_call.1} parent=1 // pred_check_branch
      %99 = sbr.rel (0) target = $region61
    $region60: #{tpu_custom_call.1} parent=1 // pred_region
      %100 = dma.done [#allocation9], 16
    $region61: #{tpu_custom_call.1} parent=1 // pred_fallthru
      _
    %v101 = vld [vmem:[%s0] sm:$0xff]
    %v102 = vld [vmem:[%s0 + $0x8] sm:$0xff]
    %v103 = vld [vmem:[%s0 + $0x10] sm:$0xff]
    %v104 = vld [vmem:[%s0 + $0x18] sm:$0xff]
    %v105 = vld [vmem:[%s1] sm:$0xff]
    %v106 = vld [vmem:[%s1 + $0x8] sm:$0xff]
    %v107 = vld [vmem:[%s1 + $0x10] sm:$0xff]
    %v108 = vld [vmem:[%s1 + $0x18] sm:$0xff]
    %v109 = vld [vmem:[#allocation8] sm:$0xff]
    %v110 = vld [vmem:[%s4] sm:$0xff]
    %v111 = vld [vmem:[%s4 + $0x8] sm:$0xff]
    %vm112 = vcmask 130048
    %v114 = vsel %vm112, %v101, 0
    %v117 = vsel %vm112, %v102, 0
    %v120 = vsel %vm112, %v103, 0
    %v123 = vsel %vm112, %v104, 0
    %125 = vmatprep.subr.mxu0 0.0
    %126 = vmatpush1.msra.mxu0 %v110
    %127 = vmatprep.subr.mxu0 0.0
    %128 = vmatpush1.msra.mxu0 %v111
    %129 = vmatprep.subr.mxu0 0.0
    %130 = vmatpush1.msra.mxu0 0.0
    %131 = vmatprep.subr.mxu0 0.0
    %132 = vmatpush1.msra.mxu0 0.0
    %133 = vmatprep.subr.mxu0 0.0
    %134 = vmatpush1.msra.mxu0 0.0
    %135 = vmatprep.subr.mxu0 0.0
    %136 = vmatpush1.msra.mxu0 0.0
    %137 = vmatprep.subr.mxu0 0.0
    %138 = vmatpush1.msra.mxu0 0.0
    %139 = vmatprep.subr.mxu0 0.0
    %140 = vmatpush1.msra.mxu0 0.0
    %141 = vmatprep.subr.mxu0 0.0
    %142 = vmatpush1.msra.mxu0 0.0
    %143 = vmatprep.subr.mxu0 0.0
    %144 = vmatpush1.msra.mxu0 0.0
    %145 = vmatprep.subr.mxu0 0.0
    %146 = vmatpush1.msra.mxu0 0.0
    %147 = vmatprep.subr.mxu0 0.0
    %148 = vmatpush1.msra.mxu0 0.0
    %149 = vmatprep.subr.mxu0 0.0
    %150 = vmatpush1.msra.mxu0 0.0
    %151 = vmatprep.subr.mxu0 0.0
    %152 = vmatpush1.msra.mxu0 0.0
    %153 = vmatprep.subr.mxu0 0.0
    %154 = vmatpush1.msra.mxu0 0.0
    %155 = vmatprep.subr.mxu0 0.0
    %156 = vmatpush1.msra.mxu0 0.0
    %157 = vmatprep.subr.mxu0 0.0
    %158 = vmatpush1.msra.mxu0 0.0
    %159 = vmatprep.subr.mxu0 0.0
    %160 = vmatpush1.msra.mxu0 0.0
    %161 = vmatprep.subr.mxu0 0.0
    %162 = vmatpush1.msra.mxu0 0.0
    %163 = vmatprep.subr.mxu0 0.0
    %164 = vmatpush1.msra.mxu0 0.0
    %165 = vmatprep.subr.mxu0 0.0
    %166 = vmatpush1.msra.mxu0 0.0
    %167 = vmatprep.subr.mxu0 0.0
    %168 = vmatpush1.msra.mxu0 0.0
    %169 = vmatprep.subr.mxu0 0.0
    %170 = vmatpush1.msra.mxu0 0.0
    %171 = vmatprep.subr.mxu0 0.0
    %172 = vmatpush1.msra.mxu0 0.0
    %173 = vmatprep.subr.mxu0 0.0
    %174 = vmatpush1.msra.mxu0 0.0
    %175 = vmatprep.subr.mxu0 0.0
    %176 = vmatpush1.msra.mxu0 0.0
    %177 = vmatprep.subr.mxu0 0.0
    %178 = vmatpush1.msra.mxu0 0.0
    %179 = vmatprep.subr.mxu0 0.0
    %180 = vmatpush1.msra.mxu0 0.0
    %181 = vmatprep.subr.mxu0 0.0
    %182 = vmatpush1.msra.mxu0 0.0
    %183 = vmatprep.subr.mxu0 0.0
    %184 = vmatpush1.msra.mxu0 0.0
    %185 = vmatprep.subr.mxu0 0.0
    %186 = vmatpush1.msra.mxu0 0.0
    %187 = vmatprep.subr.mxu0 0.0
    %188 = vmatpush1.msra.mxu0 0.0
    %189 = vmatprep.mubr.f32.mxu0 0.0
    %190 = vmatmul.mubr.f32.gmra.mrb[0].mxu0 %v114
    %v191 = vpop.f32.mrb[0].mxu0
    %v192 = vadd.f32 0.0, %v191
    %v193 = vpop.f32.mrb[0].mxu0
    %194 = vmatprep.mubr.f32.mxu0 0.0
    %195 = vmatmul.mubr.f32.gmra.mrb[0].mxu0 %v117
    %v196 = vpop.f32.mrb[0].mxu0
    %v197 = vadd.f32 0.0, %v196
    %v198 = vpop.f32.mrb[0].mxu0
    %199 = vmatprep.mubr.f32.mxu0 0.0
    %200 = vmatmul.mubr.f32.gmra.mrb[0].mxu0 %v120
    %v201 = vpop.f32.mrb[0].mxu0
    %v202 = vadd.f32 0.0, %v201
    %v203 = vpop.f32.mrb[0].mxu0
    %204 = vmatprep.mubr.f32.mxu0 0.0
    %205 = vmatmul.mubr.f32.gmra.mrb[0].mxu0 %v123
    %v206 = vpop.f32.mrb[0].mxu0
    %v207 = vadd.f32 0.0, %v206
    %v208 = vpop.f32.mrb[0].mxu0
    %209 = vdwg.mxu0
    %v210 = vld [vmem:[#allocation7] sm:$0x1]
    %v212 = vlaneseq
    %v213 = vshrl.u32 %v212, 7
    %v214 = vsub.s32 0, %v213
    %v215 = vrot.slane %v210, %v214
    %v217 = vadd.f32 %v192, %v215
    %v218 = vadd.f32 %v197, %v215
    %v219 = vadd.f32 %v202, %v215
    %v220 = vadd.f32 %v207, %v215
    %vm221 = vcmask 130112
    %v222 = vsel %vm221, %v192, 0.0
    %v223 = vrot.slane %v222, 4
    %v224 = vadd.f32 %v222, %v223
    %v225 = vrot.slane %v224, 2
    %v226 = vadd.f32 %v224, %v225
    %v227 = vrot.slane %v226, 1
    %v228 = vadd.f32 %v226, %v227
    %v229 = vsel %vm221, %v197, 0.0
    %v230 = vrot.slane %v229, 4
    %v231 = vadd.f32 %v229, %v230
    %v232 = vrot.slane %v231, 2
    %v233 = vadd.f32 %v231, %v232
    %v234 = vrot.slane %v233, 1
    %v235 = vadd.f32 %v233, %v234
    %v236 = vsel %vm221, %v202, 0.0
    %v237 = vrot.slane %v236, 4
    %v238 = vadd.f32 %v236, %v237
    %v239 = vrot.slane %v238, 2
    %v240 = vadd.f32 %v238, %v239
    %v241 = vrot.slane %v240, 1
    %v242 = vadd.f32 %v240, %v241
    %v243 = vsel %vm221, %v207, 0.0
    %v244 = vrot.slane %v243, 4
    %v245 = vadd.f32 %v243, %v244
    %v246 = vrot.slane %v245, 2
    %v247 = vadd.f32 %v245, %v246
    %v248 = vrot.slane %v247, 1
    %v249 = vadd.f32 %v247, %v248
    %v250 = vld [vmem:[#allocation2] sm:$0x1]
    %v251 = vld [vmem:[#allocation2 + $0x1] sm:$0x1]
    %v252 = vld [vmem:[#allocation2 + $0x2] sm:$0x1]
    %v253 = vld [vmem:[#allocation2 + $0x3] sm:$0x1]
    %v258 = vcombine.low %v250, %v251
    %v259 = vcombine.low %v252, %v253
    %v261 = vunpack.c.l.s4 1966171168
    %v262 = vunpack.c.0.s8 %v261
    %v263 = vlaneseq
    %v264 = vshrl.u32 %v263, 7
    %v265 = vsub.s32 %v262, %v264
    %v266 = vrot.slane %v258, %v265
    %v268 = vunpack.c.l.s4 1966171168
    %v269 = vunpack.c.0.s8 %v268
    %v270 = vlaneseq
    %v271 = vshrl.u32 %v270, 7
    %v272 = vsub.s32 %v269, %v271
    %v273 = vrot.slane %v259, %v272
    %v274 = vcombine.low %v266, %v273
    %v276 = vunpack.c.l.s4 1966171168
    %v277 = vunpack.c.0.s8 %v276
    %v278 = vlaneseq
    %v279 = vshrl.u32 %v278, 7
    %v280 = vsub.s32 %v277, %v279
    %v281 = vrot.slane %v274, %v280
    %vm282 = vcmask 64512
    %v283 = vsel %vm282, %v281, 0
    %285 = vmatprep.subr.mxu0 0.0
    %286 = vmatpush1.msra.mxu0 %v109
    %287 = vmatprep.subr.mxu0 0.0
    %288 = vmatpush1.msra.mxu0 0.0
    %289 = vmatprep.subr.mxu0 0.0
    %290 = vmatpush1.msra.mxu0 0.0
    %291 = vmatprep.subr.mxu0 0.0
    %292 = vmatpush1.msra.mxu0 0.0
    %293 = vmatprep.subr.mxu0 0.0
    %294 = vmatpush1.msra.mxu0 0.0
    %295 = vmatprep.subr.mxu0 0.0
    %296 = vmatpush1.msra.mxu0 0.0
    %297 = vmatprep.subr.mxu0 0.0
    %298 = vmatpush1.msra.mxu0 0.0
    %299 = vmatprep.subr.mxu0 0.0
    %300 = vmatpush1.msra.mxu0 0.0
    %301 = vmatprep.subr.mxu0 0.0
    %302 = vmatpush1.msra.mxu0 0.0
    %303 = vmatprep.subr.mxu0 0.0
    %304 = vmatpush1.msra.mxu0 0.0
    %305 = vmatprep.subr.mxu0 0.0
    %306 = vmatpush1.msra.mxu0 0.0
    %307 = vmatprep.subr.mxu0 0.0
    %308 = vmatpush1.msra.mxu0 0.0
    %309 = vmatprep.subr.mxu0 0.0
    %310 = vmatpush1.msra.mxu0 0.0
    %311 = vmatprep.subr.mxu0 0.0
    %312 = vmatpush1.msra.mxu0 0.0
    %313 = vmatprep.subr.mxu0 0.0
    %314 = vmatpush1.msra.mxu0 0.0
    %315 = vmatprep.subr.mxu0 0.0
    %316 = vmatpush1.msra.mxu0 0.0
    %317 = vmatprep.subr.mxu0 0.0
    %318 = vmatpush1.msra.mxu0 0.0
    %319 = vmatprep.subr.mxu0 0.0
    %320 = vmatpush1.msra.mxu0 0.0
    %321 = vmatprep.subr.mxu0 0.0
    %322 = vmatpush1.msra.mxu0 0.0
    %323 = vmatprep.subr.mxu0 0.0
    %324 = vmatpush1.msra.mxu0 0.0
    %325 = vmatprep.subr.mxu0 0.0
    %326 = vmatpush1.msra.mxu0 0.0
    %327 = vmatprep.subr.mxu0 0.0
    %328 = vmatpush1.msra.mxu0 0.0
    %329 = vmatprep.subr.mxu0 0.0
    %330 = vmatpush1.msra.mxu0 0.0
    %331 = vmatprep.subr.mxu0 0.0
    %332 = vmatpush1.msra.mxu0 0.0
    %333 = vmatprep.subr.mxu0 0.0
    %334 = vmatpush1.msra.mxu0 0.0
    %335 = vmatprep.subr.mxu0 0.0
    %336 = vmatpush1.msra.mxu0 0.0
    %337 = vmatprep.subr.mxu0 0.0
    %338 = vmatpush1.msra.mxu0 0.0
    %339 = vmatprep.subr.mxu0 0.0
    %340 = vmatpush1.msra.mxu0 0.0
    %341 = vmatprep.subr.mxu0 0.0
    %342 = vmatpush1.msra.mxu0 0.0
    %343 = vmatprep.subr.mxu0 0.0
    %344 = vmatpush1.msra.mxu0 0.0
    %345 = vmatprep.subr.mxu0 0.0
    %346 = vmatpush1.msra.mxu0 0.0
    %347 = vmatprep.subr.mxu0 0.0
    %348 = vmatpush1.msra.mxu0 0.0
    %349 = vmatprep.mubr.f32.mxu0 0.0
    %350 = vmatmul.mubr.f32.gmra.mrb[0].mxu0 %v283
    %v351 = vpop.f32.mrb[0].mxu0
    %v352 = vadd.f32 0.0, %v351
    %v353 = vpop.f32.mrb[0].mxu0
    %354 = vdwg.mxu0
    %v356 = vrot.slane %v352, 1
    %v357 = vrot.slane %v352, 2
    %v358 = vrot.slane %v352, 3
    %v363 = vadd.f32 %v217, %v352
    %v364 = vadd.f32 %v218, %v356
    %v365 = vadd.f32 %v219, %v357
    %v366 = vadd.f32 %v220, %v358
    %v367 = vtanh.pop %v363
    %v368 = vtanh.pop %v364
    %v369 = vtanh.pop %v365
    %v370 = vtanh.pop %v366
    %372 = vset.pattern.permute.xlu0 0
    %373 = vperm.xlu0 %372, %v105
    %v374 = vpop.permute.xlu0 %373
    %377 = vset.pattern.permute.xlu0 0
    %378 = vperm.xlu0 %377, %v106
    %v379 = vpop.permute.xlu0 %378
    %382 = vset.pattern.permute.xlu0 0
    %383 = vperm.xlu0 %382, %v107
    %v384 = vpop.permute.xlu0 %383
    %387 = vset.pattern.permute.xlu0 0
    %388 = vperm.xlu0 %387, %v108
    %v389 = vpop.permute.xlu0 %388
    %v391 = vmul.f32 %v374, %v367
    %v392 = vmul.f32 %v379, %v368
    %v393 = vmul.f32 %v384, %v369
    %v394 = vmul.f32 %v389, %v370
    %v395 = vadd.f32 %v250, %v391
    %v396 = vadd.f32 %v251, %v392
    %v397 = vadd.f32 %v252, %v393
    %v398 = vadd.f32 %v253, %v394
    %vm399 = vcmask 57344
    %400 = vst.msk [vmem:[#allocation12] sm:$0x1] %vm399, %v395
    %401 = vst.msk [vmem:[#allocation12 + $0x8] sm:$0x1] %vm399, %v396
    %402 = vst.msk [vmem:[#allocation12 + $0x10] sm:$0x1] %vm399, %v397
    %403 = vst.msk [vmem:[#allocation12 + $0x18] sm:$0x1] %vm399, %v398
    %v408 = vcombine.low %v395, %v396
    %v409 = vcombine.low %v397, %v398
    %v411 = vunpack.c.l.s4 1966171168
    %v412 = vunpack.c.0.s8 %v411
    %v413 = vlaneseq
    %v414 = vshrl.u32 %v413, 7
    %v415 = vsub.s32 %v412, %v414
    %v416 = vrot.slane %v408, %v415
    %v418 = vunpack.c.l.s4 1966171168
    %v419 = vunpack.c.0.s8 %v418
    %v420 = vlaneseq
    %v421 = vshrl.u32 %v420, 7
    %v422 = vsub.s32 %v419, %v421
    %v423 = vrot.slane %v409, %v422
    %v424 = vcombine.low %v416, %v423
    %v426 = vunpack.c.l.s4 1966171168
    %v427 = vunpack.c.0.s8 %v426
    %v428 = vlaneseq
    %v429 = vshrl.u32 %v428, 7
    %v430 = vsub.s32 %v427, %v429
    %v431 = vrot.slane %v424, %v430
    %v432 = vsel %vm282, %v431, 0
    %434 = vmatprep.subr.mxu0 0.0
    %435 = vmatpush1.msra.mxu0 %v109
    %436 = vmatprep.subr.mxu0 0.0
    %437 = vmatpush1.msra.mxu0 0.0
    %438 = vmatprep.subr.mxu0 0.0
    %439 = vmatpush1.msra.mxu0 0.0
    %440 = vmatprep.subr.mxu0 0.0
    %441 = vmatpush1.msra.mxu0 0.0
    %442 = vmatprep.subr.mxu0 0.0
    %443 = vmatpush1.msra.mxu0 0.0
    %444 = vmatprep.subr.mxu0 0.0
    %445 = vmatpush1.msra.mxu0 0.0
    %446 = vmatprep.subr.mxu0 0.0
    %447 = vmatpush1.msra.mxu0 0.0
    %448 = vmatprep.subr.mxu0 0.0
    %449 = vmatpush1.msra.mxu0 0.0
    %450 = vmatprep.subr.mxu0 0.0
    %451 = vmatpush1.msra.mxu0 0.0
    %452 = vmatprep.subr.mxu0 0.0
    %453 = vmatpush1.msra.mxu0 0.0
    %454 = vmatprep.subr.mxu0 0.0
    %455 = vmatpush1.msra.mxu0 0.0
    %456 = vmatprep.subr.mxu0 0.0
    %457 = vmatpush1.msra.mxu0 0.0
    %458 = vmatprep.subr.mxu0 0.0
    %459 = vmatpush1.msra.mxu0 0.0
    %460 = vmatprep.subr.mxu0 0.0
    %461 = vmatpush1.msra.mxu0 0.0
    %462 = vmatprep.subr.mxu0 0.0
    %463 = vmatpush1.msra.mxu0 0.0
    %464 = vmatprep.subr.mxu0 0.0
    %465 = vmatpush1.msra.mxu0 0.0
    %466 = vmatprep.subr.mxu0 0.0
    %467 = vmatpush1.msra.mxu0 0.0
    %468 = vmatprep.subr.mxu0 0.0
    %469 = vmatpush1.msra.mxu0 0.0
    %470 = vmatprep.subr.mxu0 0.0
    %471 = vmatpush1.msra.mxu0 0.0
    %472 = vmatprep.subr.mxu0 0.0
    %473 = vmatpush1.msra.mxu0 0.0
    %474 = vmatprep.subr.mxu0 0.0
    %475 = vmatpush1.msra.mxu0 0.0
    %476 = vmatprep.subr.mxu0 0.0
    %477 = vmatpush1.msra.mxu0 0.0
    %478 = vmatprep.subr.mxu0 0.0
    %479 = vmatpush1.msra.mxu0 0.0
    %480 = vmatprep.subr.mxu0 0.0
    %481 = vmatpush1.msra.mxu0 0.0
    %482 = vmatprep.subr.mxu0 0.0
    %483 = vmatpush1.msra.mxu0 0.0
    %484 = vmatprep.subr.mxu0 0.0
    %485 = vmatpush1.msra.mxu0 0.0
    %486 = vmatprep.subr.mxu0 0.0
    %487 = vmatpush1.msra.mxu0 0.0
    %488 = vmatprep.subr.mxu0 0.0
    %489 = vmatpush1.msra.mxu0 0.0
    %490 = vmatprep.subr.mxu0 0.0
    %491 = vmatpush1.msra.mxu0 0.0
    %492 = vmatprep.subr.mxu0 0.0
    %493 = vmatpush1.msra.mxu0 0.0
    %494 = vmatprep.subr.mxu0 0.0
    %495 = vmatpush1.msra.mxu0 0.0
    %496 = vmatprep.subr.mxu0 0.0
    %497 = vmatpush1.msra.mxu0 0.0
    %498 = vmatprep.mubr.f32.mxu0 0.0
    %499 = vmatmul.mubr.f32.gmra.mrb[0].mxu0 %v432
    %v500 = vpop.f32.mrb[0].mxu0
    %v501 = vadd.f32 0.0, %v500
    %v502 = vpop.f32.mrb[0].mxu0
    %503 = vdwg.mxu0
    %v505 = vrot.slane %v501, 7
    %v506 = vrot.slane %v501, 1
    %v507 = vrot.slane %v501, 2
    %v512 = vadd.f32 %v217, %v505
    %v513 = vadd.f32 %v218, %v501
    %v514 = vadd.f32 %v219, %v506
    %v515 = vadd.f32 %v220, %v507
    %v516 = vtanh.pop %v512
    %v517 = vtanh.pop %v513
    %v518 = vtanh.pop %v514
    %v519 = vtanh.pop %v515
    %v520 = vmul.f32 %v374, %v516
    %v521 = vmul.f32 %v379, %v517
    %v522 = vmul.f32 %v384, %v518
    %v523 = vmul.f32 %v389, %v519
    %v529 = vunpack.c.l.s4 1966171168
    %v530 = vunpack.c.0.s8 %v529
    %v531 = vlaneseq
    %v532 = vshrl.u32 %v531, 7
    %v533 = vsub.s32 %v530, %v532
    %v534 = vrot.slane %v520, %v533
    %v535 = vcombine.high %v534, %v534
    %v537 = vunpack.c.l.s4 1966171168
    %v538 = vunpack.c.0.s8 %v537
    %v539 = vlaneseq
    %v540 = vshrl.u32 %v539, 7
    %v541 = vsub.s32 %v538, %v540
    %v542 = vrot.slane %v535, %v541
    %v544 = vunpack.c.l.s4 1966171168
    %v545 = vunpack.c.0.s8 %v544
    %v546 = vlaneseq
    %v547 = vshrl.u32 %v546, 7
    %v548 = vsub.s32 %v545, %v547
    %v549 = vrot.slane %v521, %v548
    %v550 = vcombine.high %v549, %v549
    %v552 = vunpack.c.l.s4 1966171168
    %v553 = vunpack.c.0.s8 %v552
    %v554 = vlaneseq
    %v555 = vshrl.u32 %v554, 7
    %v556 = vsub.s32 %v553, %v555
    %v557 = vrot.slane %v550, %v556
    %v559 = vunpack.c.l.s4 1966171168
    %v560 = vunpack.c.0.s8 %v559
    %v561 = vlaneseq
    %v562 = vshrl.u32 %v561, 7
    %v563 = vsub.s32 %v560, %v562
    %v564 = vrot.slane %v522, %v563
    %v565 = vcombine.high %v564, %v564
    %v567 = vunpack.c.l.s4 1966171168
    %v568 = vunpack.c.0.s8 %v567
    %v569 = vlaneseq
    %v570 = vshrl.u32 %v569, 7
    %v571 = vsub.s32 %v568, %v570
    %v572 = vrot.slane %v565, %v571
    %v574 = vunpack.c.l.s4 1966171168
    %v575 = vunpack.c.0.s8 %v574
    %v576 = vlaneseq
    %v577 = vshrl.u32 %v576, 7
    %v578 = vsub.s32 %v575, %v577
    %v579 = vrot.slane %v523, %v578
    %v580 = vcombine.high %v579, %v579
    %v582 = vunpack.c.l.s4 1966171168
    %v583 = vunpack.c.0.s8 %v582
    %v584 = vlaneseq
    %v585 = vshrl.u32 %v584, 7
    %v586 = vsub.s32 %v583, %v585
    %v587 = vrot.slane %v580, %v586
    %v592 = vadd.f32 %v395, %v542
    %v593 = vadd.f32 %v396, %v557
    %v594 = vadd.f32 %v397, %v572
    %v595 = vadd.f32 %v398, %v587
    %596 = vst.msk [vmem:[#allocation12 + $0x1] sm:$0x1] %vm399, %v592
    %597 = vst.msk [vmem:[#allocation12 + $0x9] sm:$0x1] %vm399, %v593
    %598 = vst.msk [vmem:[#allocation12 + $0x11] sm:$0x1] %vm399, %v594
    %599 = vst.msk [vmem:[#allocation12 + $0x19] sm:$0x1] %vm399, %v595
    %v604 = vcombine.low %v592, %v593
    %v605 = vcombine.low %v594, %v595
    %v607 = vunpack.c.l.s4 1966171168
    %v608 = vunpack.c.0.s8 %v607
    %v609 = vlaneseq
    %v610 = vshrl.u32 %v609, 7
    %v611 = vsub.s32 %v608, %v610
    %v612 = vrot.slane %v604, %v611
    %v614 = vunpack.c.l.s4 1966171168
    %v615 = vunpack.c.0.s8 %v614
    %v616 = vlaneseq
    %v617 = vshrl.u32 %v616, 7
    %v618 = vsub.s32 %v615, %v617
    %v619 = vrot.slane %v605, %v618
    %v620 = vcombine.low %v612, %v619
    %v622 = vunpack.c.l.s4 1966171168
    %v623 = vunpack.c.0.s8 %v622
    %v624 = vlaneseq
    %v625 = vshrl.u32 %v624, 7
    %v626 = vsub.s32 %v623, %v625
    %v627 = vrot.slane %v620, %v626
    %v628 = vsel %vm282, %v627, 0
    %630 = vmatprep.subr.mxu0 0.0
    %631 = vmatpush1.msra.mxu0 %v109
    %632 = vmatprep.subr.mxu0 0.0
    %633 = vmatpush1.msra.mxu0 0.0
    %634 = vmatprep.subr.mxu0 0.0
    %635 = vmatpush1.msra.mxu0 0.0
    %636 = vmatprep.subr.mxu0 0.0
    %637 = vmatpush1.msra.mxu0 0.0
    %638 = vmatprep.subr.mxu0 0.0
    %639 = vmatpush1.msra.mxu0 0.0
    %640 = vmatprep.subr.mxu0 0.0
    %641 = vmatpush1.msra.mxu0 0.0
    %642 = vmatprep.subr.mxu0 0.0
    %643 = vmatpush1.msra.mxu0 0.0
    %644 = vmatprep.subr.mxu0 0.0
    %645 = vmatpush1.msra.mxu0 0.0
    %646 = vmatprep.subr.mxu0 0.0
    %647 = vmatpush1.msra.mxu0 0.0
    %648 = vmatprep.subr.mxu0 0.0
    %649 = vmatpush1.msra.mxu0 0.0
    %650 = vmatprep.subr.mxu0 0.0
    %651 = vmatpush1.msra.mxu0 0.0
    %652 = vmatprep.subr.mxu0 0.0
    %653 = vmatpush1.msra.mxu0 0.0
    %654 = vmatprep.subr.mxu0 0.0
    %655 = vmatpush1.msra.mxu0 0.0
    %656 = vmatprep.subr.mxu0 0.0
    %657 = vmatpush1.msra.mxu0 0.0
    %658 = vmatprep.subr.mxu0 0.0
    %659 = vmatpush1.msra.mxu0 0.0
    %660 = vmatprep.subr.mxu0 0.0
    %661 = vmatpush1.msra.mxu0 0.0
    %662 = vmatprep.subr.mxu0 0.0
    %663 = vmatpush1.msra.mxu0 0.0
    %664 = vmatprep.subr.mxu0 0.0
    %665 = vmatpush1.msra.mxu0 0.0
    %666 = vmatprep.subr.mxu0 0.0
    %667 = vmatpush1.msra.mxu0 0.0
    %668 = vmatprep.subr.mxu0 0.0
    %669 = vmatpush1.msra.mxu0 0.0
    %670 = vmatprep.subr.mxu0 0.0
    %671 = vmatpush1.msra.mxu0 0.0
    %672 = vmatprep.subr.mxu0 0.0
    %673 = vmatpush1.msra.mxu0 0.0
    %674 = vmatprep.subr.mxu0 0.0
    %675 = vmatpush1.msra.mxu0 0.0
    %676 = vmatprep.subr.mxu0 0.0
    %677 = vmatpush1.msra.mxu0 0.0
    %678 = vmatprep.subr.mxu0 0.0
    %679 = vmatpush1.msra.mxu0 0.0
    %680 = vmatprep.subr.mxu0 0.0
    %681 = vmatpush1.msra.mxu0 0.0
    %682 = vmatprep.subr.mxu0 0.0
    %683 = vmatpush1.msra.mxu0 0.0
    %684 = vmatprep.subr.mxu0 0.0
    %685 = vmatpush1.msra.mxu0 0.0
    %686 = vmatprep.subr.mxu0 0.0
    %687 = vmatpush1.msra.mxu0 0.0
    %688 = vmatprep.subr.mxu0 0.0
    %689 = vmatpush1.msra.mxu0 0.0
    %690 = vmatprep.subr.mxu0 0.0
    %691 = vmatpush1.msra.mxu0 0.0
    %692 = vmatprep.subr.mxu0 0.0
    %693 = vmatpush1.msra.mxu0 0.0
    %694 = vmatprep.mubr.f32.mxu0 0.0
    %695 = vmatmul.mubr.f32.gmra.mrb[0].mxu0 %v628
    %v696 = vpop.f32.mrb[0].mxu0
    %v697 = vadd.f32 0.0, %v696
    %v698 = vpop.f32.mrb[0].mxu0
    %699 = vdwg.mxu0
    %v701 = vrot.slane %v697, 6
    %v702 = vrot.slane %v697, 7
    %v703 = vrot.slane %v697, 1
    %v708 = vadd.f32 %v217, %v701
    %v709 = vadd.f32 %v218, %v702
    %v710 = vadd.f32 %v219, %v697
    %v711 = vadd.f32 %v220, %v703
    %v712 = vtanh.pop %v708
    %v713 = vtanh.pop %v709
    %v714 = vtanh.pop %v710
    %v715 = vtanh.pop %v711
    %v716 = vmul.f32 %v374, %v712
    %v717 = vmul.f32 %v379, %v713
    %v718 = vmul.f32 %v384, %v714
    %v719 = vmul.f32 %v389, %v715
    %v725 = vunpack.c.l.s4 1966171168
    %v726 = vunpack.c.0.s8 %v725
    %v727 = vlaneseq
    %v728 = vshrl.u32 %v727, 7
    %v729 = vsub.s32 %v726, %v728
    %v730 = vrot.slane %v716, %v729
    %v732 = vunpack.c.l.s4 1966171168
    %v733 = vunpack.c.0.s8 %v732
    %v734 = vlaneseq
    %v735 = vshrl.u32 %v734, 7
    %v736 = vsub.s32 %v733, %v735
    %v737 = vrot.slane %v730, %v736
    %v738 = vcombine.high %v737, %v737
    %v740 = vunpack.c.l.s4 1966171168
    %v741 = vunpack.c.0.s8 %v740
    %v742 = vlaneseq
    %v743 = vshrl.u32 %v742, 7
    %v744 = vsub.s32 %v741, %v743
    %v745 = vrot.slane %v717, %v744
    %v747 = vunpack.c.l.s4 1966171168
    %v748 = vunpack.c.0.s8 %v747
    %v749 = vlaneseq
    %v750 = vshrl.u32 %v749, 7
    %v751 = vsub.s32 %v748, %v750
    %v752 = vrot.slane %v745, %v751
    %v753 = vcombine.high %v752, %v752
    %v755 = vunpack.c.l.s4 1966171168
    %v756 = vunpack.c.0.s8 %v755
    %v757 = vlaneseq
    %v758 = vshrl.u32 %v757, 7
    %v759 = vsub.s32 %v756, %v758
    %v760 = vrot.slane %v718, %v759
    %v762 = vunpack.c.l.s4 1966171168
    %v763 = vunpack.c.0.s8 %v762
    %v764 = vlaneseq
    %v765 = vshrl.u32 %v764, 7
    %v766 = vsub.s32 %v763, %v765
    %v767 = vrot.slane %v760, %v766
    %v768 = vcombine.high %v767, %v767
    %v770 = vunpack.c.l.s4 1966171168
    %v771 = vunpack.c.0.s8 %v770
    %v772 = vlaneseq
    %v773 = vshrl.u32 %v772, 7
    %v774 = vsub.s32 %v771, %v773
    %v775 = vrot.slane %v719, %v774
    %v777 = vunpack.c.l.s4 1966171168
    %v778 = vunpack.c.0.s8 %v777
    %v779 = vlaneseq
    %v780 = vshrl.u32 %v779, 7
    %v781 = vsub.s32 %v778, %v780
    %v782 = vrot.slane %v775, %v781
    %v783 = vcombine.high %v782, %v782
    %v788 = vadd.f32 %v592, %v738
    %v789 = vadd.f32 %v593, %v753
    %v790 = vadd.f32 %v594, %v768
    %v791 = vadd.f32 %v595, %v783
    %792 = vst.msk [vmem:[#allocation12 + $0x2] sm:$0x1] %vm399, %v788
    %793 = vst.msk [vmem:[#allocation12 + $0xa] sm:$0x1] %vm399, %v789
    %794 = vst.msk [vmem:[#allocation12 + $0x12] sm:$0x1] %vm399, %v790
    %795 = vst.msk [vmem:[#allocation12 + $0x1a] sm:$0x1] %vm399, %v791
    %v800 = vcombine.low %v788, %v789
    %v801 = vcombine.low %v790, %v791
    %v803 = vunpack.c.l.s4 1966171168
    %v804 = vunpack.c.0.s8 %v803
    %v805 = vlaneseq
    %v806 = vshrl.u32 %v805, 7
    %v807 = vsub.s32 %v804, %v806
    %v808 = vrot.slane %v800, %v807
    %v810 = vunpack.c.l.s4 1966171168
    %v811 = vunpack.c.0.s8 %v810
    %v812 = vlaneseq
    %v813 = vshrl.u32 %v812, 7
    %v814 = vsub.s32 %v811, %v813
    %v815 = vrot.slane %v801, %v814
    %v816 = vcombine.low %v808, %v815
    %v818 = vunpack.c.l.s4 1966171168
    %v819 = vunpack.c.0.s8 %v818
    %v820 = vlaneseq
    %v821 = vshrl.u32 %v820, 7
    %v822 = vsub.s32 %v819, %v821
    %v823 = vrot.slane %v816, %v822
    %v824 = vsel %vm282, %v823, 0
    %826 = vmatprep.subr.mxu0 0.0
    %827 = vmatpush1.msra.mxu0 %v109
    %828 = vmatprep.subr.mxu0 0.0
    %829 = vmatpush1.msra.mxu0 0.0
    %830 = vmatprep.subr.mxu0 0.0
    %831 = vmatpush1.msra.mxu0 0.0
    %832 = vmatprep.subr.mxu0 0.0
    %833 = vmatpush1.msra.mxu0 0.0
    %834 = vmatprep.subr.mxu0 0.0
    %835 = vmatpush1.msra.mxu0 0.0
    %836 = vmatprep.subr.mxu0 0.0
    %837 = vmatpush1.msra.mxu0 0.0
    %838 = vmatprep.subr.mxu0 0.0
    %839 = vmatpush1.msra.mxu0 0.0
    %840 = vmatprep.subr.mxu0 0.0
    %841 = vmatpush1.msra.mxu0 0.0
    %842 = vmatprep.subr.mxu0 0.0
    %843 = vmatpush1.msra.mxu0 0.0
    %844 = vmatprep.subr.mxu0 0.0
    %845 = vmatpush1.msra.mxu0 0.0
    %846 = vmatprep.subr.mxu0 0.0
    %847 = vmatpush1.msra.mxu0 0.0
    %848 = vmatprep.subr.mxu0 0.0
    %849 = vmatpush1.msra.mxu0 0.0
    %850 = vmatprep.subr.mxu0 0.0
    %851 = vmatpush1.msra.mxu0 0.0
    %852 = vmatprep.subr.mxu0 0.0
    %853 = vmatpush1.msra.mxu0 0.0
    %854 = vmatprep.subr.mxu0 0.0
    %855 = vmatpush1.msra.mxu0 0.0
    %856 = vmatprep.subr.mxu0 0.0
    %857 = vmatpush1.msra.mxu0 0.0
    %858 = vmatprep.subr.mxu0 0.0
    %859 = vmatpush1.msra.mxu0 0.0
    %860 = vmatprep.subr.mxu0 0.0
    %861 = vmatpush1.msra.mxu0 0.0
    %862 = vmatprep.subr.mxu0 0.0
    %863 = vmatpush1.msra.mxu0 0.0
    %864 = vmatprep.subr.mxu0 0.0
    %865 = vmatpush1.msra.mxu0 0.0
    %866 = vmatprep.subr.mxu0 0.0
    %867 = vmatpush1.msra.mxu0 0.0
    %868 = vmatprep.subr.mxu0 0.0
    %869 = vmatpush1.msra.mxu0 0.0
    %870 = vmatprep.subr.mxu0 0.0
    %871 = vmatpush1.msra.mxu0 0.0
    %872 = vmatprep.subr.mxu0 0.0
    %873 = vmatpush1.msra.mxu0 0.0
    %874 = vmatprep.subr.mxu0 0.0
    %875 = vmatpush1.msra.mxu0 0.0
    %876 = vmatprep.subr.mxu0 0.0
    %877 = vmatpush1.msra.mxu0 0.0
    %878 = vmatprep.subr.mxu0 0.0
    %879 = vmatpush1.msra.mxu0 0.0
    %880 = vmatprep.subr.mxu0 0.0
    %881 = vmatpush1.msra.mxu0 0.0
    %882 = vmatprep.subr.mxu0 0.0
    %883 = vmatpush1.msra.mxu0 0.0
    %884 = vmatprep.subr.mxu0 0.0
    %885 = vmatpush1.msra.mxu0 0.0
    %886 = vmatprep.subr.mxu0 0.0
    %887 = vmatpush1.msra.mxu0 0.0
    %888 = vmatprep.subr.mxu0 0.0
    %889 = vmatpush1.msra.mxu0 0.0
    %890 = vmatprep.mubr.f32.mxu0 0.0
    %891 = vmatmul.mubr.f32.gmra.mrb[0].mxu0 %v824
    %v892 = vpop.f32.mrb[0].mxu0
    %v893 = vadd.f32 0.0, %v892
    %v894 = vpop.f32.mrb[0].mxu0
    %895 = vdwg.mxu0
    %v897 = vrot.slane %v893, 5
    %v898 = vrot.slane %v893, 6
    %v899 = vrot.slane %v893, 7
    %v904 = vadd.f32 %v217, %v897
    %v905 = vadd.f32 %v218, %v898
    %v906 = vadd.f32 %v219, %v899
    %v907 = vadd.f32 %v220, %v893
    %v908 = vtanh.pop %v904
    %v909 = vtanh.pop %v905
    %v910 = vtanh.pop %v906
    %v911 = vtanh.pop %v907
    %v912 = vmul.f32 %v374, %v908
    %v913 = vmul.f32 %v379, %v909
    %v914 = vmul.f32 %v384, %v910
    %v915 = vmul.f32 %v389, %v911
    %v921 = vunpack.c.l.s4 1966171168
    %v922 = vunpack.c.0.s8 %v921
    %v923 = vlaneseq
    %v924 = vshrl.u32 %v923, 7
    %v925 = vsub.s32 %v922, %v924
    %v926 = vrot.slane %v912, %v925
    %v927 = vcombine.high %v926, %v926
    %v929 = vunpack.c.l.s4 1966171168
    %v930 = vunpack.c.0.s8 %v929
    %v931 = vlaneseq
    %v932 = vshrl.u32 %v931, 7
    %v933 = vsub.s32 %v930, %v932
    %v934 = vrot.slane %v927, %v933
    %v935 = vcombine.high %v934, %v934
    %v937 = vunpack.c.l.s4 1966171168
    %v938 = vunpack.c.0.s8 %v937
    %v939 = vlaneseq
    %v940 = vshrl.u32 %v939, 7
    %v941 = vsub.s32 %v938, %v940
    %v942 = vrot.slane %v913, %v941
    %v943 = vcombine.high %v942, %v942
    %v945 = vunpack.c.l.s4 1966171168
    %v946 = vunpack.c.0.s8 %v945
    %v947 = vlaneseq
    %v948 = vshrl.u32 %v947, 7
    %v949 = vsub.s32 %v946, %v948
    %v950 = vrot.slane %v943, %v949
    %v951 = vcombine.high %v950, %v950
    %v953 = vunpack.c.l.s4 1966171168
    %v954 = vunpack.c.0.s8 %v953
    %v955 = vlaneseq
    %v956 = vshrl.u32 %v955, 7
    %v957 = vsub.s32 %v954, %v956
    %v958 = vrot.slane %v914, %v957
    %v959 = vcombine.high %v958, %v958
    %v961 = vunpack.c.l.s4 1966171168
    %v962 = vunpack.c.0.s8 %v961
    %v963 = vlaneseq
    %v964 = vshrl.u32 %v963, 7
    %v965 = vsub.s32 %v962, %v964
    %v966 = vrot.slane %v959, %v965
    %v967 = vcombine.high %v966, %v966
    %v969 = vunpack.c.l.s4 1966171168
    %v970 = vunpack.c.0.s8 %v969
    %v971 = vlaneseq
    %v972 = vshrl.u32 %v971, 7
    %v973 = vsub.s32 %v970, %v972
    %v974 = vrot.slane %v915, %v973
    %v975 = vcombine.high %v974, %v974
    %v977 = vunpack.c.l.s4 1966171168
    %v978 = vunpack.c.0.s8 %v977
    %v979 = vlaneseq
    %v980 = vshrl.u32 %v979, 7
    %v981 = vsub.s32 %v978, %v980
    %v982 = vrot.slane %v975, %v981
    %v983 = vcombine.high %v982, %v982
    %v988 = vadd.f32 %v788, %v935
    %v989 = vadd.f32 %v789, %v951
    %v990 = vadd.f32 %v790, %v967
    %v991 = vadd.f32 %v791, %v983
    %992 = vst.msk [vmem:[#allocation12 + $0x3] sm:$0x1] %vm399, %v988
    %993 = vst.msk [vmem:[#allocation12 + $0xb] sm:$0x1] %vm399, %v989
    %994 = vst.msk [vmem:[#allocation12 + $0x13] sm:$0x1] %vm399, %v990
    %995 = vst.msk [vmem:[#allocation12 + $0x1b] sm:$0x1] %vm399, %v991
    %v1000 = vcombine.low %v988, %v989
    %v1001 = vcombine.low %v990, %v991
    %v1003 = vunpack.c.l.s4 1966171168
    %v1004 = vunpack.c.0.s8 %v1003
    %v1005 = vlaneseq
    %v1006 = vshrl.u32 %v1005, 7
    %v1007 = vsub.s32 %v1004, %v1006
    %v1008 = vrot.slane %v1000, %v1007
    %v1010 = vunpack.c.l.s4 1966171168
    %v1011 = vunpack.c.0.s8 %v1010
    %v1012 = vlaneseq
    %v1013 = vshrl.u32 %v1012, 7
    %v1014 = vsub.s32 %v1011, %v1013
    %v1015 = vrot.slane %v1001, %v1014
    %v1016 = vcombine.low %v1008, %v1015
    %v1018 = vunpack.c.l.s4 1966171168
    %v1019 = vunpack.c.0.s8 %v1018
    %v1020 = vlaneseq
    %v1021 = vshrl.u32 %v1020, 7
    %v1022 = vsub.s32 %v1019, %v1021
    %v1023 = vrot.slane %v1016, %v1022
    %v1024 = vsel %vm282, %v1023, 0
    %1026 = vmatprep.subr.mxu0 0.0
    %1027 = vmatpush1.msra.mxu0 %v109
    %1028 = vmatprep.subr.mxu0 0.0
    %1029 = vmatpush1.msra.mxu0 0.0
    %1030 = vmatprep.subr.mxu0 0.0
    %1031 = vmatpush1.msra.mxu0 0.0
    %1032 = vmatprep.subr.mxu0 0.0
    %1033 = vmatpush1.msra.mxu0 0.0
    %1034 = vmatprep.subr.mxu0 0.0
    %1035 = vmatpush1.msra.mxu0 0.0
    %1036 = vmatprep.subr.mxu0 0.0
    %1037 = vmatpush1.msra.mxu0 0.0
    %1038 = vmatprep.subr.mxu0 0.0
    %1039 = vmatpush1.msra.mxu0 0.0
    %1040 = vmatprep.subr.mxu0 0.0
    %1041 = vmatpush1.msra.mxu0 0.0
    %1042 = vmatprep.subr.mxu0 0.0
    %1043 = vmatpush1.msra.mxu0 0.0
    %1044 = vmatprep.subr.mxu0 0.0
    %1045 = vmatpush1.msra.mxu0 0.0
    %1046 = vmatprep.subr.mxu0 0.0
    %1047 = vmatpush1.msra.mxu0 0.0
    %1048 = vmatprep.subr.mxu0 0.0
    %1049 = vmatpush1.msra.mxu0 0.0
    %1050 = vmatprep.subr.mxu0 0.0
    %1051 = vmatpush1.msra.mxu0 0.0
    %1052 = vmatprep.subr.mxu0 0.0
    %1053 = vmatpush1.msra.mxu0 0.0
    %1054 = vmatprep.subr.mxu0 0.0
    %1055 = vmatpush1.msra.mxu0 0.0
    %1056 = vmatprep.subr.mxu0 0.0
    %1057 = vmatpush1.msra.mxu0 0.0
    %1058 = vmatprep.subr.mxu0 0.0
    %1059 = vmatpush1.msra.mxu0 0.0
    %1060 = vmatprep.subr.mxu0 0.0
    %1061 = vmatpush1.msra.mxu0 0.0
    %1062 = vmatprep.subr.mxu0 0.0
    %1063 = vmatpush1.msra.mxu0 0.0
    %1064 = vmatprep.subr.mxu0 0.0
    %1065 = vmatpush1.msra.mxu0 0.0
    %1066 = vmatprep.subr.mxu0 0.0
    %1067 = vmatpush1.msra.mxu0 0.0
    %1068 = vmatprep.subr.mxu0 0.0
    %1069 = vmatpush1.msra.mxu0 0.0
    %1070 = vmatprep.subr.mxu0 0.0
    %1071 = vmatpush1.msra.mxu0 0.0
    %1072 = vmatprep.subr.mxu0 0.0
    %1073 = vmatpush1.msra.mxu0 0.0
    %1074 = vmatprep.subr.mxu0 0.0
    %1075 = vmatpush1.msra.mxu0 0.0
    %1076 = vmatprep.subr.mxu0 0.0
    %1077 = vmatpush1.msra.mxu0 0.0
    %1078 = vmatprep.subr.mxu0 0.0
    %1079 = vmatpush1.msra.mxu0 0.0
    %1080 = vmatprep.subr.mxu0 0.0
    %1081 = vmatpush1.msra.mxu0 0.0
    %1082 = vmatprep.subr.mxu0 0.0
    %1083 = vmatpush1.msra.mxu0 0.0
    %1084 = vmatprep.subr.mxu0 0.0
    %1085 = vmatpush1.msra.mxu0 0.0
    %1086 = vmatprep.subr.mxu0 0.0
    %1087 = vmatpush1.msra.mxu0 0.0
    %1088 = vmatprep.subr.mxu0 0.0
    %1089 = vmatpush1.msra.mxu0 0.0
    %1090 = vmatprep.mubr.f32.mxu0 0.0
    %1091 = vmatmul.mubr.f32.gmra.mrb[0].mxu0 %v1024
    %v1092 = vpop.f32.mrb[0].mxu0
    %v1093 = vadd.f32 0.0, %v1092
    %v1094 = vpop.f32.mrb[0].mxu0
    %1095 = vdwg.mxu0
    %v1097 = vrot.slane %v1093, 4
    %v1098 = vrot.slane %v1093, 5
    %v1099 = vrot.slane %v1093, 6
    %v1100 = vrot.slane %v1093, 7
    %v1105 = vadd.f32 %v217, %v1097
    %v1106 = vadd.f32 %v218, %v1098
    %v1107 = vadd.f32 %v219, %v1099
    %v1108 = vadd.f32 %v220, %v1100
    %v1109 = vtanh.pop %v1105
    %v1110 = vtanh.pop %v1106
    %v1111 = vtanh.pop %v1107
    %v1112 = vtanh.pop %v1108
    %v1113 = vmul.f32 %v374, %v1109
    %v1114 = vmul.f32 %v379, %v1110
    %v1115 = vmul.f32 %v384, %v1111
    %v1116 = vmul.f32 %v389, %v1112
    %v1121 = vcombine.high %v1113, %v1113
    %v1123 = vunpack.c.l.s4 1966171168
    %v1124 = vunpack.c.0.s8 %v1123
    %v1125 = vlaneseq
    %v1126 = vshrl.u32 %v1125, 7
    %v1127 = vsub.s32 %v1124, %v1126
    %v1128 = vrot.slane %v1121, %v1127
    %v1130 = vunpack.c.l.s4 1966171168
    %v1131 = vunpack.c.0.s8 %v1130
    %v1132 = vlaneseq
    %v1133 = vshrl.u32 %v1132, 7
    %v1134 = vsub.s32 %v1131, %v1133
    %v1135 = vrot.slane %v1128, %v1134
    %v1136 = vcombine.high %v1114, %v1114
    %v1138 = vunpack.c.l.s4 1966171168
    %v1139 = vunpack.c.0.s8 %v1138
    %v1140 = vlaneseq
    %v1141 = vshrl.u32 %v1140, 7
    %v1142 = vsub.s32 %v1139, %v1141
    %v1143 = vrot.slane %v1136, %v1142
    %v1145 = vunpack.c.l.s4 1966171168
    %v1146 = vunpack.c.0.s8 %v1145
    %v1147 = vlaneseq
    %v1148 = vshrl.u32 %v1147, 7
    %v1149 = vsub.s32 %v1146, %v1148
    %v1150 = vrot.slane %v1143, %v1149
    %v1151 = vcombine.high %v1115, %v1115
    %v1153 = vunpack.c.l.s4 1966171168
    %v1154 = vunpack.c.0.s8 %v1153
    %v1155 = vlaneseq
    %v1156 = vshrl.u32 %v1155, 7
    %v1157 = vsub.s32 %v1154, %v1156
    %v1158 = vrot.slane %v1151, %v1157
    %v1160 = vunpack.c.l.s4 1966171168
    %v1161 = vunpack.c.0.s8 %v1160
    %v1162 = vlaneseq
    %v1163 = vshrl.u32 %v1162, 7
    %v1164 = vsub.s32 %v1161, %v1163
    %v1165 = vrot.slane %v1158, %v1164
    %v1166 = vcombine.high %v1116, %v1116
    %v1168 = vunpack.c.l.s4 1966171168
    %v1169 = vunpack.c.0.s8 %v1168
    %v1170 = vlaneseq
    %v1171 = vshrl.u32 %v1170, 7
    %v1172 = vsub.s32 %v1169, %v1171
    %v1173 = vrot.slane %v1166, %v1172
    %v1175 = vunpack.c.l.s4 1966171168
    %v1176 = vunpack.c.0.s8 %v1175
    %v1177 = vlaneseq
    %v1178 = vshrl.u32 %v1177, 7
    %v1179 = vsub.s32 %v1176, %v1178
    %v1180 = vrot.slane %v1173, %v1179
    %v1185 = vadd.f32 %v988, %v1135
    %v1186 = vadd.f32 %v989, %v1150
    %v1187 = vadd.f32 %v990, %v1165
    %v1188 = vadd.f32 %v991, %v1180
    %1189 = vst.msk [vmem:[#allocation12 + $0x4] sm:$0x1] %vm399, %v1185
    %1190 = vst.msk [vmem:[#allocation12 + $0xc] sm:$0x1] %vm399, %v1186
    %1191 = vst.msk [vmem:[#allocation12 + $0x14] sm:$0x1] %vm399, %v1187
    %1192 = vst.msk [vmem:[#allocation12 + $0x1c] sm:$0x1] %vm399, %v1188
    %v1197 = vcombine.low %v1185, %v1186
    %v1198 = vcombine.low %v1187, %v1188
    %v1200 = vunpack.c.l.s4 1966171168
    %v1201 = vunpack.c.0.s8 %v1200
    %v1202 = vlaneseq
    %v1203 = vshrl.u32 %v1202, 7
    %v1204 = vsub.s32 %v1201, %v1203
    %v1205 = vrot.slane %v1197, %v1204
    %v1207 = vunpack.c.l.s4 1966171168
    %v1208 = vunpack.c.0.s8 %v1207
    %v1209 = vlaneseq
    %v1210 = vshrl.u32 %v1209, 7
    %v1211 = vsub.s32 %v1208, %v1210
    %v1212 = vrot.slane %v1198, %v1211
    %v1213 = vcombine.low %v1205, %v1212
    %v1215 = vunpack.c.l.s4 1966171168
    %v1216 = vunpack.c.0.s8 %v1215
    %v1217 = vlaneseq
    %v1218 = vshrl.u32 %v1217, 7
    %v1219 = vsub.s32 %v1216, %v1218
    %v1220 = vrot.slane %v1213, %v1219
    %v1221 = vsel %vm282, %v1220, 0
    %1223 = vmatprep.subr.mxu0 0.0
    %1224 = vmatpush1.msra.mxu0 %v109
    %1225 = vmatprep.subr.mxu0 0.0
    %1226 = vmatpush1.msra.mxu0 0.0
    %1227 = vmatprep.subr.mxu0 0.0
    %1228 = vmatpush1.msra.mxu0 0.0
    %1229 = vmatprep.subr.mxu0 0.0
    %1230 = vmatpush1.msra.mxu0 0.0
    %1231 = vmatprep.subr.mxu0 0.0
    %1232 = vmatpush1.msra.mxu0 0.0
    %1233 = vmatprep.subr.mxu0 0.0
    %1234 = vmatpush1.msra.mxu0 0.0
    %1235 = vmatprep.subr.mxu0 0.0
    %1236 = vmatpush1.msra.mxu0 0.0
    %1237 = vmatprep.subr.mxu0 0.0
    %1238 = vmatpush1.msra.mxu0 0.0
    %1239 = vmatprep.subr.mxu0 0.0
    %1240 = vmatpush1.msra.mxu0 0.0
    %1241 = vmatprep.subr.mxu0 0.0
    %1242 = vmatpush1.msra.mxu0 0.0
    %1243 = vmatprep.subr.mxu0 0.0
    %1244 = vmatpush1.msra.mxu0 0.0
    %1245 = vmatprep.subr.mxu0 0.0
    %1246 = vmatpush1.msra.mxu0 0.0
    %1247 = vmatprep.subr.mxu0 0.0
    %1248 = vmatpush1.msra.mxu0 0.0
    %1249 = vmatprep.subr.mxu0 0.0
    %1250 = vmatpush1.msra.mxu0 0.0
    %1251 = vmatprep.subr.mxu0 0.0
    %1252 = vmatpush1.msra.mxu0 0.0
    %1253 = vmatprep.subr.mxu0 0.0
    %1254 = vmatpush1.msra.mxu0 0.0
    %1255 = vmatprep.subr.mxu0 0.0
    %1256 = vmatpush1.msra.mxu0 0.0
    %1257 = vmatprep.subr.mxu0 0.0
    %1258 = vmatpush1.msra.mxu0 0.0
    %1259 = vmatprep.subr.mxu0 0.0
    %1260 = vmatpush1.msra.mxu0 0.0
    %1261 = vmatprep.subr.mxu0 0.0
    %1262 = vmatpush1.msra.mxu0 0.0
    %1263 = vmatprep.subr.mxu0 0.0
    %1264 = vmatpush1.msra.mxu0 0.0
    %1265 = vmatprep.subr.mxu0 0.0
    %1266 = vmatpush1.msra.mxu0 0.0
    %1267 = vmatprep.subr.mxu0 0.0
    %1268 = vmatpush1.msra.mxu0 0.0
    %1269 = vmatprep.subr.mxu0 0.0
    %1270 = vmatpush1.msra.mxu0 0.0
    %1271 = vmatprep.subr.mxu0 0.0
    %1272 = vmatpush1.msra.mxu0 0.0
    %1273 = vmatprep.subr.mxu0 0.0
    %1274 = vmatpush1.msra.mxu0 0.0
    %1275 = vmatprep.subr.mxu0 0.0
    %1276 = vmatpush1.msra.mxu0 0.0
    %1277 = vmatprep.subr.mxu0 0.0
    %1278 = vmatpush1.msra.mxu0 0.0
    %1279 = vmatprep.subr.mxu0 0.0
    %1280 = vmatpush1.msra.mxu0 0.0
    %1281 = vmatprep.subr.mxu0 0.0
    %1282 = vmatpush1.msra.mxu0 0.0
    %1283 = vmatprep.subr.mxu0 0.0
    %1284 = vmatpush1.msra.mxu0 0.0
    %1285 = vmatprep.subr.mxu0 0.0
    %1286 = vmatpush1.msra.mxu0 0.0
    %1287 = vmatprep.mubr.f32.mxu0 0.0
    %1288 = vmatmul.mubr.f32.gmra.mrb[0].mxu0 %v1221
    %v1289 = vpop.f32.mrb[0].mxu0
    %v1290 = vadd.f32 0.0, %v1289
    %v1291 = vpop.f32.mrb[0].mxu0
    %1292 = vdwg.mxu0
    %v1294 = vrot.slane %v1290, 3
    %v1295 = vrot.slane %v1290, 4
    %v1296 = vrot.slane %v1290, 5
    %v1297 = vrot.slane %v1290, 6
    %v1302 = vadd.f32 %v217, %v1294
    %v1303 = vadd.f32 %v218, %v1295
    %v1304 = vadd.f32 %v219, %v1296
    %v1305 = vadd.f32 %v220, %v1297
    %v1306 = vtanh.pop %v1302
    %v1307 = vtanh.pop %v1303
    %v1308 = vtanh.pop %v1304
    %v1309 = vtanh.pop %v1305
    %v1310 = vmul.f32 %v374, %v1306
    %v1311 = vmul.f32 %v379, %v1307
    %v1312 = vmul.f32 %v384, %v1308
    %v1313 = vmul.f32 %v389, %v1309
    %v1318 = vcombine.high %v1310, %v1310
    %v1320 = vunpack.c.l.s4 1966171168
    %v1321 = vunpack.c.0.s8 %v1320
    %v1322 = vlaneseq
    %v1323 = vshrl.u32 %v1322, 7
    %v1324 = vsub.s32 %v1321, %v1323
    %v1325 = vrot.slane %v1318, %v1324
    %v1326 = vcombine.high %v1325, %v1325
    %v1328 = vunpack.c.l.s4 1966171168
    %v1329 = vunpack.c.0.s8 %v1328
    %v1330 = vlaneseq
    %v1331 = vshrl.u32 %v1330, 7
    %v1332 = vsub.s32 %v1329, %v1331
    %v1333 = vrot.slane %v1326, %v1332
    %v1334 = vcombine.high %v1311, %v1311
    %v1336 = vunpack.c.l.s4 1966171168
    %v1337 = vunpack.c.0.s8 %v1336
    %v1338 = vlaneseq
    %v1339 = vshrl.u32 %v1338, 7
    %v1340 = vsub.s32 %v1337, %v1339
    %v1341 = vrot.slane %v1334, %v1340
    %v1342 = vcombine.high %v1341, %v1341
    %v1344 = vunpack.c.l.s4 1966171168
    %v1345 = vunpack.c.0.s8 %v1344
    %v1346 = vlaneseq
    %v1347 = vshrl.u32 %v1346, 7
    %v1348 = vsub.s32 %v1345, %v1347
    %v1349 = vrot.slane %v1342, %v1348
    %v1350 = vcombine.high %v1312, %v1312
    %v1352 = vunpack.c.l.s4 1966171168
    %v1353 = vunpack.c.0.s8 %v1352
    %v1354 = vlaneseq
    %v1355 = vshrl.u32 %v1354, 7
    %v1356 = vsub.s32 %v1353, %v1355
    %v1357 = vrot.slane %v1350, %v1356
    %v1358 = vcombine.high %v1357, %v1357
    %v1360 = vunpack.c.l.s4 1966171168
    %v1361 = vunpack.c.0.s8 %v1360
    %v1362 = vlaneseq
    %v1363 = vshrl.u32 %v1362, 7
    %v1364 = vsub.s32 %v1361, %v1363
    %v1365 = vrot.slane %v1358, %v1364
    %v1366 = vcombine.high %v1313, %v1313
    %v1368 = vunpack.c.l.s4 1966171168
    %v1369 = vunpack.c.0.s8 %v1368
    %v1370 = vlaneseq
    %v1371 = vshrl.u32 %v1370, 7
    %v1372 = vsub.s32 %v1369, %v1371
    %v1373 = vrot.slane %v1366, %v1372
    %v1374 = vcombine.high %v1373, %v1373
    %v1376 = vunpack.c.l.s4 1966171168
    %v1377 = vunpack.c.0.s8 %v1376
    %v1378 = vlaneseq
    %v1379 = vshrl.u32 %v1378, 7
    %v1380 = vsub.s32 %v1377, %v1379
    %v1381 = vrot.slane %v1374, %v1380
    %v1386 = vadd.f32 %v1185, %v1333
    %v1387 = vadd.f32 %v1186, %v1349
    %v1388 = vadd.f32 %v1187, %v1365
    %v1389 = vadd.f32 %v1188, %v1381
    %1390 = vst.msk [vmem:[#allocation12 + $0x5] sm:$0x1] %vm399, %v1386
    %1391 = vst.msk [vmem:[#allocation12 + $0xd] sm:$0x1] %vm399, %v1387
    %1392 = vst.msk [vmem:[#allocation12 + $0x15] sm:$0x1] %vm399, %v1388
    %1393 = vst.msk [vmem:[#allocation12 + $0x1d] sm:$0x1] %vm399, %v1389
    %v1398 = vcombine.low %v1386, %v1387
    %v1399 = vcombine.low %v1388, %v1389
    %v1401 = vunpack.c.l.s4 1966171168
    %v1402 = vunpack.c.0.s8 %v1401
    %v1403 = vlaneseq
    %v1404 = vshrl.u32 %v1403, 7
    %v1405 = vsub.s32 %v1402, %v1404
    %v1406 = vrot.slane %v1398, %v1405
    %v1408 = vunpack.c.l.s4 1966171168
    %v1409 = vunpack.c.0.s8 %v1408
    %v1410 = vlaneseq
    %v1411 = vshrl.u32 %v1410, 7
    %v1412 = vsub.s32 %v1409, %v1411
    %v1413 = vrot.slane %v1399, %v1412
    %v1414 = vcombine.low %v1406, %v1413
    %v1416 = vunpack.c.l.s4 1966171168
    %v1417 = vunpack.c.0.s8 %v1416
    %v1418 = vlaneseq
    %v1419 = vshrl.u32 %v1418, 7
    %v1420 = vsub.s32 %v1417, %v1419
    %v1421 = vrot.slane %v1414, %v1420
    %v1422 = vsel %vm282, %v1421, 0
    %1424 = vmatprep.subr.mxu0 0.0
    %1425 = vmatpush1.msra.mxu0 %v109
    %1426 = vmatprep.subr.mxu0 0.0
    %1427 = vmatpush1.msra.mxu0 0.0
    %1428 = vmatprep.subr.mxu0 0.0
    %1429 = vmatpush1.msra.mxu0 0.0
    %1430 = vmatprep.subr.mxu0 0.0
    %1431 = vmatpush1.msra.mxu0 0.0
    %1432 = vmatprep.subr.mxu0 0.0
    %1433 = vmatpush1.msra.mxu0 0.0
    %1434 = vmatprep.subr.mxu0 0.0
    %1435 = vmatpush1.msra.mxu0 0.0
    %1436 = vmatprep.subr.mxu0 0.0
    %1437 = vmatpush1.msra.mxu0 0.0
    %1438 = vmatprep.subr.mxu0 0.0
    %1439 = vmatpush1.msra.mxu0 0.0
    %1440 = vmatprep.subr.mxu0 0.0
    %1441 = vmatpush1.msra.mxu0 0.0
    %1442 = vmatprep.subr.mxu0 0.0
    %1443 = vmatpush1.msra.mxu0 0.0
    %1444 = vmatprep.subr.mxu0 0.0
    %1445 = vmatpush1.msra.mxu0 0.0
    %1446 = vmatprep.subr.mxu0 0.0
    %1447 = vmatpush1.msra.mxu0 0.0
    %1448 = vmatprep.subr.mxu0 0.0
    %1449 = vmatpush1.msra.mxu0 0.0
    %1450 = vmatprep.subr.mxu0 0.0
    %1451 = vmatpush1.msra.mxu0 0.0
    %1452 = vmatprep.subr.mxu0 0.0
    %1453 = vmatpush1.msra.mxu0 0.0
    %1454 = vmatprep.subr.mxu0 0.0
    %1455 = vmatpush1.msra.mxu0 0.0
    %1456 = vmatprep.subr.mxu0 0.0
    %1457 = vmatpush1.msra.mxu0 0.0
    %1458 = vmatprep.subr.mxu0 0.0
    %1459 = vmatpush1.msra.mxu0 0.0
    %1460 = vmatprep.subr.mxu0 0.0
    %1461 = vmatpush1.msra.mxu0 0.0
    %1462 = vmatprep.subr.mxu0 0.0
    %1463 = vmatpush1.msra.mxu0 0.0
    %1464 = vmatprep.subr.mxu0 0.0
    %1465 = vmatpush1.msra.mxu0 0.0
    %1466 = vmatprep.subr.mxu0 0.0
    %1467 = vmatpush1.msra.mxu0 0.0
    %1468 = vmatprep.subr.mxu0 0.0
    %1469 = vmatpush1.msra.mxu0 0.0
    %1470 = vmatprep.subr.mxu0 0.0
    %1471 = vmatpush1.msra.mxu0 0.0
    %1472 = vmatprep.subr.mxu0 0.0
    %1473 = vmatpush1.msra.mxu0 0.0
    %1474 = vmatprep.subr.mxu0 0.0
    %1475 = vmatpush1.msra.mxu0 0.0
    %1476 = vmatprep.subr.mxu0 0.0
    %1477 = vmatpush1.msra.mxu0 0.0
    %1478 = vmatprep.subr.mxu0 0.0
    %1479 = vmatpush1.msra.mxu0 0.0
    %1480 = vmatprep.subr.mxu0 0.0
    %1481 = vmatpush1.msra.mxu0 0.0
    %1482 = vmatprep.subr.mxu0 0.0
    %1483 = vmatpush1.msra.mxu0 0.0
    %1484 = vmatprep.subr.mxu0 0.0
    %1485 = vmatpush1.msra.mxu0 0.0
    %1486 = vmatprep.subr.mxu0 0.0
    %1487 = vmatpush1.msra.mxu0 0.0
    %1488 = vmatprep.mubr.f32.mxu0 0.0
    %1489 = vmatmul.mubr.f32.gmra.mrb[0].mxu0 %v1422
    %v1490 = vpop.f32.mrb[0].mxu0
    %v1491 = vadd.f32 0.0, %v1490
    %v1492 = vpop.f32.mrb[0].mxu0
    %1493 = vdwg.mxu0
    %v1495 = vrot.slane %v1491, 2
    %v1496 = vrot.slane %v1491, 3
    %v1497 = vrot.slane %v1491, 4
    %v1498 = vrot.slane %v1491, 5
    %v1503 = vadd.f32 %v217, %v1495
    %v1504 = vadd.f32 %v218, %v1496
    %v1505 = vadd.f32 %v219, %v1497
    %v1506 = vadd.f32 %v220, %v1498
    %v1507 = vtanh.pop %v1503
    %v1508 = vtanh.pop %v1504
    %v1509 = vtanh.pop %v1505
    %v1510 = vtanh.pop %v1506
    %v1511 = vmul.f32 %v374, %v1507
    %v1512 = vmul.f32 %v379, %v1508
    %v1513 = vmul.f32 %v384, %v1509
    %v1514 = vmul.f32 %v389, %v1510
    %v1519 = vcombine.high %v1511, %v1511
    %v1521 = vunpack.c.l.s4 1966171168
    %v1522 = vunpack.c.0.s8 %v1521
    %v1523 = vlaneseq
    %v1524 = vshrl.u32 %v1523, 7
    %v1525 = vsub.s32 %v1522, %v1524
    %v1526 = vrot.slane %v1519, %v1525
    %v1528 = vunpack.c.l.s4 1966171168
    %v1529 = vunpack.c.0.s8 %v1528
    %v1530 = vlaneseq
    %v1531 = vshrl.u32 %v1530, 7
    %v1532 = vsub.s32 %v1529, %v1531
    %v1533 = vrot.slane %v1526, %v1532
    %v1534 = vcombine.high %v1533, %v1533
    %v1535 = vcombine.high %v1512, %v1512
    %v1537 = vunpack.c.l.s4 1966171168
    %v1538 = vunpack.c.0.s8 %v1537
    %v1539 = vlaneseq
    %v1540 = vshrl.u32 %v1539, 7
    %v1541 = vsub.s32 %v1538, %v1540
    %v1542 = vrot.slane %v1535, %v1541
    %v1544 = vunpack.c.l.s4 1966171168
    %v1545 = vunpack.c.0.s8 %v1544
    %v1546 = vlaneseq
    %v1547 = vshrl.u32 %v1546, 7
    %v1548 = vsub.s32 %v1545, %v1547
    %v1549 = vrot.slane %v1542, %v1548
    %v1550 = vcombine.high %v1549, %v1549
    %v1551 = vcombine.high %v1513, %v1513
    %v1553 = vunpack.c.l.s4 1966171168
    %v1554 = vunpack.c.0.s8 %v1553
    %v1555 = vlaneseq
    %v1556 = vshrl.u32 %v1555, 7
    %v1557 = vsub.s32 %v1554, %v1556
    %v1558 = vrot.slane %v1551, %v1557
    %v1560 = vunpack.c.l.s4 1966171168
    %v1561 = vunpack.c.0.s8 %v1560
    %v1562 = vlaneseq
    %v1563 = vshrl.u32 %v1562, 7
    %v1564 = vsub.s32 %v1561, %v1563
    %v1565 = vrot.slane %v1558, %v1564
    %v1566 = vcombine.high %v1565, %v1565
    %v1567 = vcombine.high %v1514, %v1514
    %v1569 = vunpack.c.l.s4 1966171168
    %v1570 = vunpack.c.0.s8 %v1569
    %v1571 = vlaneseq
    %v1572 = vshrl.u32 %v1571, 7
    %v1573 = vsub.s32 %v1570, %v1572
    %v1574 = vrot.slane %v1567, %v1573
    %v1576 = vunpack.c.l.s4 1966171168
    %v1577 = vunpack.c.0.s8 %v1576
    %v1578 = vlaneseq
    %v1579 = vshrl.u32 %v1578, 7
    %v1580 = vsub.s32 %v1577, %v1579
    %v1581 = vrot.slane %v1574, %v1580
    %v1582 = vcombine.high %v1581, %v1581
    %v1587 = vadd.f32 %v1386, %v1534
    %v1588 = vadd.f32 %v1387, %v1550
    %v1589 = vadd.f32 %v1388, %v1566
    %v1590 = vadd.f32 %v1389, %v1582
    %1591 = vst.msk [vmem:[#allocation12 + $0x6] sm:$0x1] %vm399, %v1587
    %1592 = vst.msk [vmem:[#allocation12 + $0xe] sm:$0x1] %vm399, %v1588
    %1593 = vst.msk [vmem:[#allocation12 + $0x16] sm:$0x1] %vm399, %v1589
    %1594 = vst.msk [vmem:[#allocation12 + $0x1e] sm:$0x1] %vm399, %v1590
    %v1599 = vcombine.low %v1587, %v1588
    %v1600 = vcombine.low %v1589, %v1590
    %v1602 = vunpack.c.l.s4 1966171168
    %v1603 = vunpack.c.0.s8 %v1602
    %v1604 = vlaneseq
    %v1605 = vshrl.u32 %v1604, 7
    %v1606 = vsub.s32 %v1603, %v1605
    %v1607 = vrot.slane %v1599, %v1606
    %v1609 = vunpack.c.l.s4 1966171168
    %v1610 = vunpack.c.0.s8 %v1609
    %v1611 = vlaneseq
    %v1612 = vshrl.u32 %v1611, 7
    %v1613 = vsub.s32 %v1610, %v1612
    %v1614 = vrot.slane %v1600, %v1613
    %v1615 = vcombine.low %v1607, %v1614
    %v1617 = vunpack.c.l.s4 1966171168
    %v1618 = vunpack.c.0.s8 %v1617
    %v1619 = vlaneseq
    %v1620 = vshrl.u32 %v1619, 7
    %v1621 = vsub.s32 %v1618, %v1620
    %v1622 = vrot.slane %v1615, %v1621
    %v1623 = vsel %vm282, %v1622, 0
    %1625 = vmatprep.subr.mxu0 0.0
    %1626 = vmatpush1.msra.mxu0 %v109
    %1627 = vmatprep.subr.mxu0 0.0
    %1628 = vmatpush1.msra.mxu0 0.0
    %1629 = vmatprep.subr.mxu0 0.0
    %1630 = vmatpush1.msra.mxu0 0.0
    %1631 = vmatprep.subr.mxu0 0.0
    %1632 = vmatpush1.msra.mxu0 0.0
    %1633 = vmatprep.subr.mxu0 0.0
    %1634 = vmatpush1.msra.mxu0 0.0
    %1635 = vmatprep.subr.mxu0 0.0
    %1636 = vmatpush1.msra.mxu0 0.0
    %1637 = vmatprep.subr.mxu0 0.0
    %1638 = vmatpush1.msra.mxu0 0.0
    %1639 = vmatprep.subr.mxu0 0.0
    %1640 = vmatpush1.msra.mxu0 0.0
    %1641 = vmatprep.subr.mxu0 0.0
    %1642 = vmatpush1.msra.mxu0 0.0
    %1643 = vmatprep.subr.mxu0 0.0
    %1644 = vmatpush1.msra.mxu0 0.0
    %1645 = vmatprep.subr.mxu0 0.0
    %1646 = vmatpush1.msra.mxu0 0.0
    %1647 = vmatprep.subr.mxu0 0.0
    %1648 = vmatpush1.msra.mxu0 0.0
    %1649 = vmatprep.subr.mxu0 0.0
    %1650 = vmatpush1.msra.mxu0 0.0
    %1651 = vmatprep.subr.mxu0 0.0
    %1652 = vmatpush1.msra.mxu0 0.0
    %1653 = vmatprep.subr.mxu0 0.0
    %1654 = vmatpush1.msra.mxu0 0.0
    %1655 = vmatprep.subr.mxu0 0.0
    %1656 = vmatpush1.msra.mxu0 0.0
    %1657 = vmatprep.subr.mxu0 0.0
    %1658 = vmatpush1.msra.mxu0 0.0
    %1659 = vmatprep.subr.mxu0 0.0
    %1660 = vmatpush1.msra.mxu0 0.0
    %1661 = vmatprep.subr.mxu0 0.0
    %1662 = vmatpush1.msra.mxu0 0.0
    %1663 = vmatprep.subr.mxu0 0.0
    %1664 = vmatpush1.msra.mxu0 0.0
    %1665 = vmatprep.subr.mxu0 0.0
    %1666 = vmatpush1.msra.mxu0 0.0
    %1667 = vmatprep.subr.mxu0 0.0
    %1668 = vmatpush1.msra.mxu0 0.0
    %1669 = vmatprep.subr.mxu0 0.0
    %1670 = vmatpush1.msra.mxu0 0.0
    %1671 = vmatprep.subr.mxu0 0.0
    %1672 = vmatpush1.msra.mxu0 0.0
    %1673 = vmatprep.subr.mxu0 0.0
    %1674 = vmatpush1.msra.mxu0 0.0
    %1675 = vmatprep.subr.mxu0 0.0
    %1676 = vmatpush1.msra.mxu0 0.0
    %1677 = vmatprep.subr.mxu0 0.0
    %1678 = vmatpush1.msra.mxu0 0.0
    %1679 = vmatprep.subr.mxu0 0.0
    %1680 = vmatpush1.msra.mxu0 0.0
    %1681 = vmatprep.subr.mxu0 0.0
    %1682 = vmatpush1.msra.mxu0 0.0
    %1683 = vmatprep.subr.mxu0 0.0
    %1684 = vmatpush1.msra.mxu0 0.0
    %1685 = vmatprep.subr.mxu0 0.0
    %1686 = vmatpush1.msra.mxu0 0.0
    %1687 = vmatprep.subr.mxu0 0.0
    %1688 = vmatpush1.msra.mxu0 0.0
    %1689 = vmatprep.mubr.f32.mxu0 0.0
    %1690 = vmatmul.mubr.f32.gmra.mrb[0].mxu0 %v1623
    %v1691 = vpop.f32.mrb[0].mxu0
    %v1692 = vadd.f32 0.0, %v1691
    %v1693 = vpop.f32.mrb[0].mxu0
    %1694 = vdwg.mxu0
    %v1696 = vrot.slane %v1692, 1
    %v1697 = vrot.slane %v1692, 2
    %v1698 = vrot.slane %v1692, 3
    %v1699 = vrot.slane %v1692, 4
    %v1704 = vadd.f32 %v217, %v1696
    %v1705 = vadd.f32 %v218, %v1697
    %v1706 = vadd.f32 %v219, %v1698
    %v1707 = vadd.f32 %v220, %v1699
    %v1708 = vtanh.pop %v1704
    %v1709 = vtanh.pop %v1705
    %v1710 = vtanh.pop %v1706
    %v1711 = vtanh.pop %v1707
    %v1712 = vmul.f32 %v374, %v1708
    %v1713 = vmul.f32 %v379, %v1709
    %v1714 = vmul.f32 %v384, %v1710
    %v1715 = vmul.f32 %v389, %v1711
    %v1720 = vcombine.high %v1712, %v1712
    %v1722 = vunpack.c.l.s4 1966171168
    %v1723 = vunpack.c.0.s8 %v1722
    %v1724 = vlaneseq
    %v1725 = vshrl.u32 %v1724, 7
    %v1726 = vsub.s32 %v1723, %v1725
    %v1727 = vrot.slane %v1720, %v1726
    %v1728 = vcombine.high %v1727, %v1727
    %v1730 = vunpack.c.l.s4 1966171168
    %v1731 = vunpack.c.0.s8 %v1730
    %v1732 = vlaneseq
    %v1733 = vshrl.u32 %v1732, 7
    %v1734 = vsub.s32 %v1731, %v1733
    %v1735 = vrot.slane %v1728, %v1734
    %v1736 = vcombine.high %v1735, %v1735
    %v1737 = vcombine.high %v1713, %v1713
    %v1739 = vunpack.c.l.s4 1966171168
    %v1740 = vunpack.c.0.s8 %v1739
    %v1741 = vlaneseq
    %v1742 = vshrl.u32 %v1741, 7
    %v1743 = vsub.s32 %v1740, %v1742
    %v1744 = vrot.slane %v1737, %v1743
    %v1745 = vcombine.high %v1744, %v1744
    %v1747 = vunpack.c.l.s4 1966171168
    %v1748 = vunpack.c.0.s8 %v1747
    %v1749 = vlaneseq
    %v1750 = vshrl.u32 %v1749, 7
    %v1751 = vsub.s32 %v1748, %v1750
    %v1752 = vrot.slane %v1745, %v1751
    %v1753 = vcombine.high %v1752, %v1752
    %v1754 = vcombine.high %v1714, %v1714
    %v1756 = vunpack.c.l.s4 1966171168
    %v1757 = vunpack.c.0.s8 %v1756
    %v1758 = vlaneseq
    %v1759 = vshrl.u32 %v1758, 7
    %v1760 = vsub.s32 %v1757, %v1759
    %v1761 = vrot.slane %v1754, %v1760
    %v1762 = vcombine.high %v1761, %v1761
    %v1764 = vunpack.c.l.s4 1966171168
    %v1765 = vunpack.c.0.s8 %v1764
    %v1766 = vlaneseq
    %v1767 = vshrl.u32 %v1766, 7
    %v1768 = vsub.s32 %v1765, %v1767
    %v1769 = vrot.slane %v1762, %v1768
    %v1770 = vcombine.high %v1769, %v1769
    %v1771 = vcombine.high %v1715, %v1715
    %v1773 = vunpack.c.l.s4 1966171168
    %v1774 = vunpack.c.0.s8 %v1773
    %v1775 = vlaneseq
    %v1776 = vshrl.u32 %v1775, 7
    %v1777 = vsub.s32 %v1774, %v1776
    %v1778 = vrot.slane %v1771, %v1777
    %v1779 = vcombine.high %v1778, %v1778
    %v1781 = vunpack.c.l.s4 1966171168
    %v1782 = vunpack.c.0.s8 %v1781
    %v1783 = vlaneseq
    %v1784 = vshrl.u32 %v1783, 7
    %v1785 = vsub.s32 %v1782, %v1784
    %v1786 = vrot.slane %v1779, %v1785
    %v1787 = vcombine.high %v1786, %v1786
    %v1792 = vadd.f32 %v1587, %v1736
    %v1793 = vadd.f32 %v1588, %v1753
    %v1794 = vadd.f32 %v1589, %v1770
    %v1795 = vadd.f32 %v1590, %v1787
    %1796 = vst.msk [vmem:[#allocation12 + $0x7] sm:$0x1] %vm399, %v1792
    %1797 = vst.msk [vmem:[#allocation12 + $0xf] sm:$0x1] %vm399, %v1793
    %1798 = vst.msk [vmem:[#allocation12 + $0x17] sm:$0x1] %vm399, %v1794
    %1799 = vst.msk [vmem:[#allocation12 + $0x1f] sm:$0x1] %vm399, %v1795
    %v1800 = vld [vmem:[#allocation10] sm:$0x1]
    %v1802 = vlaneseq
    %v1803 = vshrl.u32 %v1802, 7
    %v1804 = vsub.s32 0, %v1803
    %v1805 = vrot.slane %v1800, %v1804
    %1806 = vrot.lane.b32.xlu0 %v1805, 8
    %v1807 = vpop.permute.xlu0 %1806
    %v1809 = vadd.f32 %v228, %v1807
    %v1810 = vadd.f32 %v235, %v1807
    %v1811 = vadd.f32 %v242, %v1807
    %v1812 = vadd.f32 %v249, %v1807
    %v1813 = vmax.f32 %v1809, 0.0
    %v1814 = vmax.f32 %v1810, 0.0
    %v1815 = vmax.f32 %v1811, 0.0
    %v1816 = vmax.f32 %v1812, 0.0
    %v1817 = vld [vmem:[%s8] sm:$0xff]
    %v1818 = vld [vmem:[%s8 + $0x8] sm:$0xff]
    %v1819 = vld [vmem:[%s9] sm:$0x3]
    %v1821 = vlaneseq
    %v1822 = vshrl.u32 %v1821, 7
    %v1823 = vsub.s32 0, %v1822
    %v1824 = vrot.slane %v1819, %v1823
    %v1825 = vlaneseq
    %v1826 = vshrl.u32 %v1825, 7
    %v1827 = vsub.s32 1, %v1826
    %v1828 = vrot.slane %v1819, %v1827
    %v1835 = vrot.slane %v1814, 7
    %vm1836 = vcmask 1041409
    %v1837 = vsel %vm1836, %v1835, %v1813
    %v1838 = vrot.slane %v1815, 6
    %vm1839 = vcmask 1042434
    %v1840 = vsel %vm1839, %v1838, %v1837
    %v1841 = vrot.slane %v1816, 5
    %vm1842 = vcmask 1043459
    %v1843 = vsel %vm1842, %v1841, %v1840
    %1844 = vrot.lane.b32.xlu0 %v1843, 120
    %v1845 = vpop.permute.xlu0 %1844
    %v1846 = vsel %vm282, %v1845, 0
    %1848 = vmatprep.subr.mxu0 %v1818
    %1849 = vmatpush1.msra.mxu0 %v1817
    %1850 = vmatprep.subr.mxu0 0.0
    %1851 = vmatpush1.msra.mxu0 0.0
    %1852 = vmatprep.subr.mxu0 0.0
    %1853 = vmatpush1.msra.mxu0 0.0
    %1854 = vmatprep.subr.mxu0 0.0
    %1855 = vmatpush1.msra.mxu0 0.0
    %1856 = vmatprep.subr.mxu0 0.0
    %1857 = vmatpush1.msra.mxu0 0.0
    %1858 = vmatprep.subr.mxu0 0.0
    %1859 = vmatpush1.msra.mxu0 0.0
    %1860 = vmatprep.subr.mxu0 0.0
    %1861 = vmatpush1.msra.mxu0 0.0
    %1862 = vmatprep.subr.mxu0 0.0
    %1863 = vmatpush1.msra.mxu0 0.0
    %1864 = vmatprep.subr.mxu0 0.0
    %1865 = vmatpush1.msra.mxu0 0.0
    %1866 = vmatprep.subr.mxu0 0.0
    %1867 = vmatpush1.msra.mxu0 0.0
    %1868 = vmatprep.subr.mxu0 0.0
    %1869 = vmatpush1.msra.mxu0 0.0
    %1870 = vmatprep.subr.mxu0 0.0
    %1871 = vmatpush1.msra.mxu0 0.0
    %1872 = vmatprep.subr.mxu0 0.0
    %1873 = vmatpush1.msra.mxu0 0.0
    %1874 = vmatprep.subr.mxu0 0.0
    %1875 = vmatpush1.msra.mxu0 0.0
    %1876 = vmatprep.subr.mxu0 0.0
    %1877 = vmatpush1.msra.mxu0 0.0
    %1878 = vmatprep.subr.mxu0 0.0
    %1879 = vmatpush1.msra.mxu0 0.0
    %1880 = vmatprep.subr.mxu0 0.0
    %1881 = vmatpush1.msra.mxu0 0.0
    %1882 = vmatprep.subr.mxu0 0.0
    %1883 = vmatpush1.msra.mxu0 0.0
    %1884 = vmatprep.subr.mxu0 0.0
    %1885 = vmatpush1.msra.mxu0 0.0
    %1886 = vmatprep.subr.mxu0 0.0
    %1887 = vmatpush1.msra.mxu0 0.0
    %1888 = vmatprep.subr.mxu0 0.0
    %1889 = vmatpush1.msra.mxu0 0.0
    %1890 = vmatprep.subr.mxu0 0.0
    %1891 = vmatpush1.msra.mxu0 0.0
    %1892 = vmatprep.subr.mxu0 0.0
    %1893 = vmatpush1.msra.mxu0 0.0
    %1894 = vmatprep.subr.mxu0 0.0
    %1895 = vmatpush1.msra.mxu0 0.0
    %1896 = vmatprep.subr.mxu0 0.0
    %1897 = vmatpush1.msra.mxu0 0.0
    %1898 = vmatprep.subr.mxu0 0.0
    %1899 = vmatpush1.msra.mxu0 0.0
    %1900 = vmatprep.subr.mxu0 0.0
    %1901 = vmatpush1.msra.mxu0 0.0
    %1902 = vmatprep.subr.mxu0 0.0
    %1903 = vmatpush1.msra.mxu0 0.0
    %1904 = vmatprep.subr.mxu0 0.0
    %1905 = vmatpush1.msra.mxu0 0.0
    %1906 = vmatprep.subr.mxu0 0.0
    %1907 = vmatpush1.msra.mxu0 0.0
    %1908 = vmatprep.subr.mxu0 0.0
    %1909 = vmatpush1.msra.mxu0 0.0
    %1910 = vmatprep.subr.mxu0 0.0
    %1911 = vmatpush1.msra.mxu0 0.0
    %1912 = vmatprep.mubr.f32.mxu0 0.0
    %1913 = vmatmul.mubr.f32.gmra.mrb[0].mxu0 %v1846
    %v1914 = vpop.f32.mrb[0].mxu0
    %v1915 = vadd.f32 %v1824, %v1914
    %v1916 = vpop.f32.mrb[0].mxu0
    %v1917 = vadd.f32 %v1828, %v1916
    %1918 = vdwg.mxu0
    %v1919 = vmul.f32 %v1917, 0.5
    %v1920 = vmul.f32 %v1919, 1.442695
    %v1921 = vpow.pop %v1920
    %v1922 = vld [vmem:[#allocation5] sm:$0x1]
    %v1923 = vld [vmem:[#allocation5 + $0x1] sm:$0x1]
    %v1924 = vld [vmem:[#allocation5 + $0x2] sm:$0x1]
    %v1925 = vld [vmem:[#allocation5 + $0x3] sm:$0x1]
    %v1928 = vunpack.c.l.s4 1966171168
    %v1929 = vunpack.c.0.s8 %v1928
    %v1930 = vlaneseq
    %v1931 = vshrl.u32 %v1930, 7
    %v1932 = vsub.s32 %v1929, %v1931
    %v1933 = vrot.slane %v1921, %v1932
    %v1934 = vcombine.high %v1933, %v1933
    %v1936 = vunpack.c.l.s4 1966171168
    %v1937 = vunpack.c.0.s8 %v1936
    %v1938 = vlaneseq
    %v1939 = vshrl.u32 %v1938, 7
    %v1940 = vsub.s32 %v1937, %v1939
    %v1941 = vrot.slane %v1933, %v1940
    %v1943 = vunpack.c.l.s4 1966171168
    %v1944 = vunpack.c.0.s8 %v1943
    %v1945 = vlaneseq
    %v1946 = vshrl.u32 %v1945, 7
    %v1947 = vsub.s32 %v1944, %v1946
    %v1948 = vrot.slane %v1934, %v1947
    %v1949 = vcombine.high %v1941, %v1941
    %v1950 = vcombine.high %v1948, %v1948
    %v1955 = vmul.f32 %v1922, %v1941
    %v1956 = vmul.f32 %v1923, %v1948
    %v1957 = vmul.f32 %v1924, %v1949
    %v1958 = vmul.f32 %v1925, %v1950
    %v1961 = vunpack.c.l.s4 1966171168
    %v1962 = vunpack.c.0.s8 %v1961
    %v1963 = vlaneseq
    %v1964 = vshrl.u32 %v1963, 7
    %v1965 = vsub.s32 %v1962, %v1964
    %v1966 = vrot.slane %v1915, %v1965
    %v1967 = vcombine.high %v1966, %v1966
    %v1969 = vunpack.c.l.s4 1966171168
    %v1970 = vunpack.c.0.s8 %v1969
    %v1971 = vlaneseq
    %v1972 = vshrl.u32 %v1971, 7
    %v1973 = vsub.s32 %v1970, %v1972
    %v1974 = vrot.slane %v1966, %v1973
    %v1976 = vunpack.c.l.s4 1966171168
    %v1977 = vunpack.c.0.s8 %v1976
    %v1978 = vlaneseq
    %v1979 = vshrl.u32 %v1978, 7
    %v1980 = vsub.s32 %v1977, %v1979
    %v1981 = vrot.slane %v1967, %v1980
    %v1982 = vcombine.high %v1974, %v1974
    %v1983 = vcombine.high %v1981, %v1981
    %v1988 = vadd.f32 %v1955, %v1974
    %v1989 = vadd.f32 %v1956, %v1981
    %v1990 = vadd.f32 %v1957, %v1982
    %v1991 = vadd.f32 %v1958, %v1983
    %v1992 = vmul.f32 %v1988, 0.5
    %v1993 = vmul.f32 %v1989, 0.5
    %v1994 = vmul.f32 %v1990, 0.5
    %v1995 = vmul.f32 %v1991, 0.5
    %v1996 = vtanh.pop %v1992
    %v1997 = vtanh.pop %v1993
    %v1998 = vtanh.pop %v1994
    %v1999 = vtanh.pop %v1995
    %v2000 = vmul.f32 %v1996, 0.5
    %v2001 = vmul.f32 %v1997, 0.5
    %v2002 = vmul.f32 %v1998, 0.5
    %v2003 = vmul.f32 %v1999, 0.5
    %v2004 = vadd.f32 %v2000, 0.5
    %v2005 = vadd.f32 %v2001, 0.5
    %v2006 = vadd.f32 %v2002, 0.5
    %v2007 = vadd.f32 %v2003, 0.5
    %v2012 = vcombine.low %v2004, %v2005
    %v2013 = vcombine.low %v2006, %v2007
    %v2015 = vunpack.c.l.s4 1966171168
    %v2016 = vunpack.c.0.s8 %v2015
    %v2017 = vlaneseq
    %v2018 = vshrl.u32 %v2017, 7
    %v2019 = vsub.s32 %v2016, %v2018
    %v2020 = vrot.slane %v2012, %v2019
    %v2022 = vunpack.c.l.s4 1966171168
    %v2023 = vunpack.c.0.s8 %v2022
    %v2024 = vlaneseq
    %v2025 = vshrl.u32 %v2024, 7
    %v2026 = vsub.s32 %v2023, %v2025
    %v2027 = vrot.slane %v2013, %v2026
    %v2028 = vcombine.low %v2020, %v2027
    %v2030 = vunpack.c.l.s4 1966171168
    %v2031 = vunpack.c.0.s8 %v2030
    %v2032 = vlaneseq
    %v2033 = vshrl.u32 %v2032, 7
    %v2034 = vsub.s32 %v2031, %v2033
    %v2035 = vrot.slane %v2028, %v2034
    %v2037 = vcombine.low %v2035, %v1915
    %v2039 = vunpack.c.l.s4 1966171168
    %v2040 = vunpack.c.0.s8 %v2039
    %v2041 = vlaneseq
    %v2042 = vshrl.u32 %v2041, 7
    %v2043 = vsub.s32 %v2040, %v2042
    %v2044 = vrot.slane %v2037, %v2043
    %v2046 = vunpack.c.l.s4 1966171168
    %v2047 = vunpack.c.0.s8 %v2046
    %v2048 = vlaneseq
    %v2049 = vshrl.u32 %v2048, 7
    %v2050 = vsub.s32 %v2047, %v2049
    %v2051 = vrot.slane %v1917, %v2050
    %v2052 = vcombine.low %v2044, %v2051
    %v2053 = vcombine.high %v2044, %v2051
    %v2055 = vunpack.c.l.s4 1966171168
    %v2056 = vunpack.c.0.s8 %v2055
    %v2057 = vlaneseq
    %v2058 = vshrl.u32 %v2057, 7
    %v2059 = vsub.s32 %v2056, %v2058
    %v2060 = vrot.slane %v2052, %v2059
    %v2062 = vunpack.c.l.s4 1966171168
    %v2063 = vunpack.c.0.s8 %v2062
    %v2064 = vlaneseq
    %v2065 = vshrl.u32 %v2064, 7
    %v2066 = vsub.s32 %v2063, %v2065
    %v2067 = vrot.slane %v2053, %v2066
    %v2068 = vcombine.high %v2060, %v2060
    %v2069 = vcombine.high %v2067, %v2067
    %v2074 = vlaneseq
    %vm2075 = vcmp.ge.s32.totalorder %v2074, 0
    %vm2076 = vcmp.lt.s32.totalorder %v2074, 384
    %vm2077 = vmand %vm2075, %vm2076
    %2078 = vst.msk [vmem:[#allocation11] sm:$0x7] %vm2077, %v2060
    %2079 = vst.msk [vmem:[#allocation11 + $0x3] sm:$0x7] %vm2077, %v2067
    %2080 = vst.msk [vmem:[#allocation11 + $0x6] sm:$0x7] %vm2077, %v2068
    %2081 = vst.msk [vmem:[#allocation11 + $0x9] sm:$0x7] %vm2077, %v2069
    // Predicated region
    $region62: #{tpu_custom_call.1} parent=1 // pred_check
      _
    $region63: #{tpu_custom_call.1} parent=1 // pred_check_branch
      %2083 = sbr.rel (0) target = $region65
    $region64: #{tpu_custom_call.1} parent=1 // pred_region
      %s2085 = ssub.s32 192, 192
      %2086 = vsyncadd [#allocation4], %s2085
      %s2087 = sshll.u32 [#allocation11], 4
      %s2088 = int_to_ptr.vmem [resolvable:$true] %s2087
      %2093 = dma.vmem_to_hbm [thread:$0]  %s2088, 192, %s10, [#allocation4], 48, 48, 3
    $region65: #{tpu_custom_call.1} parent=1 // pred_fallthru
      _
    // Predicated region
    $region66: #{tpu_custom_call.1} parent=1 // pred_check
      _
    $region67: #{tpu_custom_call.1} parent=1 // pred_check_branch
      %2095 = sbr.rel (0) target = $region69
    $region68: #{tpu_custom_call.1} parent=1 // pred_region
      %s2097 = ssub.s32 512, 512
      %2098 = vsyncadd [#allocation13], %s2097
      %s2099 = sshll.u32 [#allocation12], 4
      %s2100 = int_to_ptr.vmem [resolvable:$true] %s2099
      %2105 = dma.vmem_to_hbm [thread:$0]  %s2100, 512, %s11, [#allocation13], 128, 128, 8
    $region69: #{tpu_custom_call.1} parent=1 // pred_fallthru
      _
    // Predicated region
    $region70: #{tpu_custom_call.1} parent=1 // pred_check
      _
    $region71: #{tpu_custom_call.1} parent=1 // pred_check_branch
      %2107 = sbr.rel (0) target = $region73
    $region72: #{tpu_custom_call.1} parent=1 // pred_region
      %2108 = dma.done [#allocation4], 192
    $region73: #{tpu_custom_call.1} parent=1 // pred_fallthru
      _
    // Predicated region
    $region74: #{tpu_custom_call.1} parent=1 // pred_check
      _
    $region75: #{tpu_custom_call.1} parent=1 // pred_check_branch
      %2110 = sbr.rel (0) target = $region77
    $region76: #{tpu_custom_call.1} parent=1 // pred_region
      %2111 = dma.done [#allocation13], 512
    $region77: #{tpu_custom_call.1} parent=1 // pred_fallthru
      _
    %2112 = vsyncpa [#allocation3], 1
    %2113 = vsyncpa [#allocation6], 1
    %2114 = vsyncpa [#allocation9], 1
    %2115 = vsyncpa [#allocation4], 1
    %2116 = vsyncpa [#allocation13], 1

</llo_original>
